<compile_context>
chip_gen: v7x
topology: tpu7x:2x2x1
jax: 0.10.0
libtpu: 0.0.40
codegen_flags: <defaults>
</compile_context>

<pallas_src>
import math

import jax
import jax.numpy as jnp
from jax.experimental import pallas as pl
from jax.experimental.pallas import tpu as pltpu


def _make_nary_kernel(bases, bit_widths, reduction, embedding_dim,
                      mxu_min_base, use_bf16_mxu, nd_output):
    """nd_output=True  -> out block is (bn, out_dim)  (flip done in-kernel, XLU)
       nd_output=False -> out block is (out_dim, bn)  (wrapper transposes)"""
    n_bases = len(bases)
    D = embedding_dim
    inv_n = 1.0 / n_bases

    def kernel(x_ref, *refs):
        table_refs = refs[:n_bases]          # each (D, base) f32 (pre-transposed)
        out_ref = refs[n_bases]

        x = x_ref[...]                        # (1, TN) int32, non-negative
        tn = x.shape[1]

        acc = None                            # running (D, TN) sum for 'sum'/'mean'
        for bi, (base, bit_width) in enumerate(zip(bases, bit_widths)):
            tbl_t = table_refs[bi][...]       # (D, base)
            pow2 = (base & (base - 1)) == 0
            shift = int(base).bit_length() - 1

            def next_digit(d, _base=base, _pow2=pow2, _shift=shift):
                if _pow2:                     # power-of-two base: shift/mask
                    return d & (_base - 1), d >> _shift
                # constant divisor: Mosaic strength-reduces to mulhi+shift
                # TODO(synk): f32 reciprocal-multiply path when base**bw <= 2^24.
                q = jax.lax.div(d, jnp.int32(_base))
                return d - q * _base, q

            if base < mxu_min_base:
                # --- tiny-base VPU path: (base-1) count rows, each (1, TN) f32 ---
                cnt = [jnp.zeros((1, tn), jnp.float32) for _ in range(base - 1)]
                d = x
                for _ in range(bit_width):
                    rem, d = next_digit(d)
                    if base == 2:             # the bit IS the count contribution
                        cnt[0] = cnt[0] + rem.astype(jnp.float32)
                    else:
                        for v in range(1, base):
                            cnt[v - 1] = cnt[v - 1] + (rem == v).astype(jnp.float32)
                # digit-0 count is implied:  emb = bw*t0 + sum_v cnt_v * (t_v - t0)
                emb = jnp.broadcast_to(tbl_t[:, 0:1] * jnp.float32(bit_width), (D, tn))
                for v in range(1, base):
                    emb = emb + (tbl_t[:, v:v + 1] - tbl_t[:, 0:1]) * cnt[v - 1]
            else:
                # --- larger base: full (base, TN) f32 count matrix -> MXU -------
                vals = jax.lax.broadcasted_iota(jnp.int32, (base, tn), 0)
                counts = jnp.zeros((base, tn), jnp.float32)
                d = x
                for _ in range(bit_width):
                    rem, d = next_digit(d)
                    counts = counts + (rem == vals).astype(jnp.float32)
                if use_bf16_mxu:
                    # counts <= bit_width <= 255 are exact in bf16; table in bf16
                    # adds ~1e-3 relative rounding (off by default).
                    emb = jnp.dot(tbl_t.astype(jnp.bfloat16),
                                  counts.astype(jnp.bfloat16),
                                  preferred_element_type=jnp.float32)
                else:
                    emb = jnp.dot(tbl_t, counts,
                                  preferred_element_type=jnp.float32)

            if reduction == 'concat':
                if nd_output:
                    # flip this base's tile on the XLU; per-base transposes can
                    # overlap the next base's VALU digit work.
                    out_ref[:, bi * D:(bi + 1) * D] = emb.T.astype(out_ref.dtype)
                else:
                    out_ref[bi * D:(bi + 1) * D, :] = emb.astype(out_ref.dtype)
            else:
                acc = emb if acc is None else acc + emb

        if reduction in ('sum', 'mean'):
            if reduction == 'mean':
                acc = acc * jnp.float32(inv_n)
            out_ref[...] = (acc.T if nd_output else acc).astype(out_ref.dtype)

    return kernel


def _vmem_capacity_bytes():
    try:
        cap = getattr(pltpu.get_tpu_info(), "vmem_capacity_bytes", None)
        if cap:
            return int(cap)
    except Exception:
        pass
    return 64 << 20          # conservative default: v7x per-TensorCore VMEM


def nary_dis_embedding(inputs, tables, encode_bases, bit_widths,
                       bit_width_action='error', reduction='concat',
                       block_n=None, out_dtype=jnp.float32,
                       mxu_min_base=8, use_bf16_mxu=False, validate=False):
    """Forward pass of NaryDisEmbedding.

    inputs:  integer array, any shape, non-negative values (module contract).
    tables:  list of (base, embedding_dim) float32 embedding tables, one per base.
    Returns: array of shape inputs.shape + (out_dim,) in `out_dtype`
             (use out_dtype=jnp.bfloat16 on store-bandwidth-bound v5e).
    mxu_min_base: bases >= this go through the MXU (lower to 4 on v6e/v7x
             together with use_bf16_mxu=True; keep 8 on v5e).
    """
    if not isinstance(encode_bases, (list, tuple)):
        encode_bases = [encode_bases]
    encode_bases = [int(b) for b in encode_bases]
    if not isinstance(bit_widths, (list, tuple)):
        bit_widths = [bit_widths] * len(encode_bases)
    bit_widths = [int(b) for b in bit_widths]          # local copy, never mutate caller's
    assert len(encode_bases) == len(bit_widths)
    assert all(b >= 2 for b in encode_bases)
    embedding_dim = int(tables[0].shape[1])            # multiple of 8 keeps stores unmasked
    n_bases = len(encode_bases)

    if reduction == 'concat':
        out_dim = embedding_dim * n_bases
    elif reduction in ('sum', 'mean'):
        out_dim = embedding_dim
    else:
        raise ValueError(f"Invalid reduction operation: {reduction}")

    x = jnp.asarray(inputs).astype(jnp.int32)
    orig_shape = x.shape
    xf = x.reshape(-1)
    n = xf.shape[0]
    if n == 0:
        return jnp.zeros(orig_shape + (out_dim,), out_dtype)

    # bit_width_action handling:
    #   'error':  bit widths stay static -> no device->host sync on the hot path
    #             (pass validate=True to reproduce PyTorch's blocking max() check).
    #   'trunc':  torch.remainder(x, base**bw) only clears digits above position bw
    #             and the kernel only consumes the low bw digits -> no-op here.
    #   'expand': inherently data dependent -> only this path pays a host sync.
    if bit_width_action not in ('error', 'trunc', 'expand'):
        raise ValueError(f"Invalid bit_width_action: {bit_width_action}")
    if bit_width_action == 'expand' or (bit_width_action == 'error' and validate):
        max_value = int(jax.device_get(jnp.max(xf)))
        for i, (base, bw) in enumerate(zip(encode_bases, bit_widths)):
            req = math.ceil(math.log(max_value + 1, base)) if max_value > 0 else 0
            if req > bw:
                if bit_width_action == 'expand':
                    bit_widths[i] = req
                else:
                    raise ValueError(
                        f'bit_width={bw} is insufficient to represent values in '
                        f'base-{base}. Minimum required bit width is {req}.')

    # ---- tile sizing: N on lanes, budgeted against generation-aware VMEM ------
    tables_t = [jnp.asarray(t, jnp.float32).T for t in tables]   # (D, base) each
    tbl_bytes = sum(int(t.shape[0]) * int(t.shape[1]) * 4 for t in tables_t)
    out_isz = jnp.dtype(out_dtype).itemsize

    vmem_cap = _vmem_capacity_bytes()
    # ~38 MiB budget on 64 MiB (v7x) parts, ~100 MiB on 128 MiB (v5e/v6e) parts.
    budget = int(vmem_cap * (0.8 if vmem_cap >= (96 << 20) else 0.6))

    def _tile_bytes(bn_):
        io = 2 * bn_ * 4                              # int32 input tile (double-buffered)
        io += 2 * bn_ * out_dim * out_isz             # output tile (double-buffered)
        io += 2 * tbl_bytes                           # resident tables
        max_rows = max((b if b >= mxu_min_base else max(b - 1, 1))
                       for b in encode_bases)
        tmp = max_rows * bn_ * 4                      # count rows / matrix (f32)
        tmp += 3 * embedding_dim * bn_ * 4            # emb + transposed emb + acc
        tmp += 2 * bn_ * 4                            # digit stream / misc
        return io + tmp

    bn = 8192 if block_n is None else max(128, (int(block_n) // 128) * 128)
    while bn > 128 and _tile_bytes(bn) > budget:
        bn //= 2
    bn = max(128, (bn // 128) * 128)
    # Keep >= 2 grid steps so both v7x TensorCores get work ("parallel" axis);
    # on 1-TC chips the extra step costs ~0.35us.
    bn = min(bn, max(128, pl.cdiv(n, 2 * 128) * 128))

    grid = (pl.cdiv(n, bn),)                          # ragged last block handled by Pallas
    vmem_limit = int(min(max(2 * _tile_bytes(bn), 32 << 20),
                         max(vmem_cap - (8 << 20), 32 << 20)))

    def _call(nd_output):
        kernel = _make_nary_kernel(tuple(encode_bases), tuple(bit_widths),
                                   reduction, embedding_dim,
                                   mxu_min_base, use_bf16_mxu, nd_output)
        in_specs = [pl.BlockSpec((1, bn), lambda i: (0, i))]
        for t in tables_t:
            in_specs.append(pl.BlockSpec(t.shape, lambda i: (0, 0)))
        if nd_output:
            out_specs = pl.BlockSpec((bn, out_dim), lambda i: (i, 0))
            out_shape = jax.ShapeDtypeStruct((n, out_dim), out_dtype)
        else:
            out_specs = pl.BlockSpec((out_dim, bn), lambda i: (0, i))
            out_shape = jax.ShapeDtypeStruct((out_dim, n), out_dtype)
        return pl.pallas_call(
            kernel,
            out_shape=out_shape,
            grid_spec=pltpu.PrefetchScalarGridSpec(
                num_scalar_prefetch=0,
                grid=grid,
                in_specs=in_specs,
                out_specs=out_specs,
            ),
            compiler_params=pltpu.CompilerParams(
                dimension_semantics=("parallel",),
                vmem_limit_bytes=vmem_limit,
            ),
        )(xf.reshape(1, n), *tables_t)

    try:
        out = _call(nd_output=True)       # output leaves the kernel as (N, out_dim)
    except Exception:
        # Fallback: if this Mosaic build cannot lower the standalone (D, bn)
        # transpose, use the previously-validated (out_dim, N) layout + XLA .T
        # (costs ~3x output HBM traffic but is always lowerable).
        out = _call(nd_output=False).T

    return out.reshape(*orig_shape, out_dim)


def nary_dis_embedding_ref(inputs, tables, encode_bases, bit_widths, reduction):
    """Pure-JAX reference mirroring the PyTorch forward (common path)."""
    if not isinstance(bit_widths, (list, tuple)):
        bit_widths = [bit_widths] * len(encode_bases)
    x = jnp.asarray(inputs).astype(jnp.int32)
    embs = []
    for tbl, base, bw in zip(tables, encode_bases, bit_widths):
        digits = []
        d = x
        for _ in range(bw):
            digits.append(jnp.remainder(d, base))
            d = d // base
        nary = jnp.stack(digits[::-1], axis=-1)           # (..., bw)
        emb = jnp.take(tbl, nary, axis=0)                 # (..., bw, D)
        embs.append(emb.sum(axis=-2))                     # (..., D)
    if reduction == 'concat':
        return jnp.concatenate(embs, axis=-1)
    elif reduction == 'mean':
        return jnp.mean(jnp.stack(embs), axis=0)
    elif reduction == 'sum':
        return jnp.sum(jnp.stack(embs), axis=0)


if __name__ == "__main__":
    key = jax.random.PRNGKey(0)

    embedding_dim = 32
    encode_bases = [2, 3]
    bit_widths = 8
    n = 256

    # Deterministic parameter init: nn.Embedding(base, D).weight ~ N(0, 0.01)
    k_in, k2, k3 = jax.random.split(key, 3)
    tables = [
        jax.random.normal(k2, (2, embedding_dim), jnp.float32) * 0.01,
        jax.random.normal(k3, (3, embedding_dim), jnp.float32) * 0.01,
    ]

    # Unsigned integer inputs representable within bit_width=8 for both bases.
    x = jax.random.randint(k_in, (n,), 0, 256, dtype=jnp.int32)

    # 'concat' path.
    out = nary_dis_embedding(x, tables, encode_bases, bit_widths,
                             bit_width_action='error', reduction='concat')
    out = jax.block_until_ready(out)
    ref = nary_dis_embedding_ref(x, tables, encode_bases, bit_widths, 'concat')
    assert out.shape == (n, 2 * embedding_dim), out.shape
    assert jnp.allclose(out, ref, atol=1e-5, rtol=1e-5), \
        float(jnp.max(jnp.abs(out - ref)))

    # 'mean' path with n not a multiple of 128 (exercises the ragged last block).
    x2 = jax.random.randint(k_in, (200,), 0, 200, dtype=jnp.int32)
    out2 = jax.block_until_ready(
        nary_dis_embedding(x2, tables, encode_bases, bit_widths,
                           bit_width_action='error', reduction='mean'))
    ref2 = nary_dis_embedding_ref(x2, tables, encode_bases, bit_widths, 'mean')
    assert out2.shape == (200, embedding_dim), out2.shape
    assert jnp.allclose(out2, ref2, atol=1e-5, rtol=1e-5), \
        float(jnp.max(jnp.abs(out2 - ref2)))

    print("KERNEL_OK")
</pallas_src>

<mosaic_0001>
module attributes {stable_mosaic.version = 11 : i64} {
  func.func @kernel(%arg0: i32, %arg1: memref<1x128xi32, #tpu.memory_space<vmem>>, %arg2: memref<32x2xf32, #tpu.memory_space<vmem>>, %arg3: memref<32x3xf32, #tpu.memory_space<vmem>>, %arg4: memref<128x64xf32, #tpu.memory_space<vmem>>) attributes {dimension_semantics = [#tpu.dimension_semantics<parallel>], iteration_bounds = array<i64: 2>, scalar_prefetch = 0 : i64, scratch_operands = 0 : i64, tpu.core_type = #tpu.core_type<tc>, window_params = [{transform_indices = @transform_0, window_bounds = array<i64: 1, 128>}, {pipeline_mode = #tpu.pipeline_mode<synchronous>, transform_indices = @transform_1, window_bounds = array<i64: 32, 2>}, {pipeline_mode = #tpu.pipeline_mode<synchronous>, transform_indices = @transform_2, window_bounds = array<i64: 32, 3>}, {transform_indices = @transform_3, window_bounds = array<i64: 128, 64>}]} {
    %c0 = arith.constant 0 : index
    %c0_0 = arith.constant 0 : index
    %0 = vector.load %arg1[%c0, %c0_0] : memref<1x128xi32, #tpu.memory_space<vmem>>, vector<1x128xi32>
    %c0_1 = arith.constant 0 : index
    %c0_2 = arith.constant 0 : index
    %1 = vector.load %arg2[%c0_1, %c0_2] : memref<32x2xf32, #tpu.memory_space<vmem>>, vector<32x2xf32>
    %cst = arith.constant 0.000000e+00 : f32
    %2 = vector.broadcast %cst : f32 to vector<1x128xf32>
    %c1_i32 = arith.constant 1 : i32
    %3 = vector.broadcast %c1_i32 : i32 to vector<1x128xi32>
    %4 = arith.andi %0, %3 : vector<1x128xi32>
    %c1_i32_3 = arith.constant 1 : i32
    %5 = vector.broadcast %c1_i32_3 : i32 to vector<1x128xi32>
    %6 = arith.shrsi %0, %5 : vector<1x128xi32>
    %7 = arith.sitofp %4 : vector<1x128xi32> to vector<1x128xf32>
    %8 = arith.addf %2, %7 : vector<1x128xf32>
    %c1_i32_4 = arith.constant 1 : i32
    %9 = vector.broadcast %c1_i32_4 : i32 to vector<1x128xi32>
    %10 = arith.andi %6, %9 : vector<1x128xi32>
    %c1_i32_5 = arith.constant 1 : i32
    %11 = vector.broadcast %c1_i32_5 : i32 to vector<1x128xi32>
    %12 = arith.shrsi %6, %11 : vector<1x128xi32>
    %13 = arith.sitofp %10 : vector<1x128xi32> to vector<1x128xf32>
    %14 = arith.addf %8, %13 : vector<1x128xf32>
    %c1_i32_6 = arith.constant 1 : i32
    %15 = vector.broadcast %c1_i32_6 : i32 to vector<1x128xi32>
    %16 = arith.andi %12, %15 : vector<1x128xi32>
    %c1_i32_7 = arith.constant 1 : i32
    %17 = vector.broadcast %c1_i32_7 : i32 to vector<1x128xi32>
    %18 = arith.shrsi %12, %17 : vector<1x128xi32>
    %19 = arith.sitofp %16 : vector<1x128xi32> to vector<1x128xf32>
    %20 = arith.addf %14, %19 : vector<1x128xf32>
    %c1_i32_8 = arith.constant 1 : i32
    %21 = vector.broadcast %c1_i32_8 : i32 to vector<1x128xi32>
    %22 = arith.andi %18, %21 : vector<1x128xi32>
    %c1_i32_9 = arith.constant 1 : i32
    %23 = vector.broadcast %c1_i32_9 : i32 to vector<1x128xi32>
    %24 = arith.shrsi %18, %23 : vector<1x128xi32>
    %25 = arith.sitofp %22 : vector<1x128xi32> to vector<1x128xf32>
    %26 = arith.addf %20, %25 : vector<1x128xf32>
    %c1_i32_10 = arith.constant 1 : i32
    %27 = vector.broadcast %c1_i32_10 : i32 to vector<1x128xi32>
    %28 = arith.andi %24, %27 : vector<1x128xi32>
    %c1_i32_11 = arith.constant 1 : i32
    %29 = vector.broadcast %c1_i32_11 : i32 to vector<1x128xi32>
    %30 = arith.shrsi %24, %29 : vector<1x128xi32>
    %31 = arith.sitofp %28 : vector<1x128xi32> to vector<1x128xf32>
    %32 = arith.addf %26, %31 : vector<1x128xf32>
    %c1_i32_12 = arith.constant 1 : i32
    %33 = vector.broadcast %c1_i32_12 : i32 to vector<1x128xi32>
    %34 = arith.andi %30, %33 : vector<1x128xi32>
    %c1_i32_13 = arith.constant 1 : i32
    %35 = vector.broadcast %c1_i32_13 : i32 to vector<1x128xi32>
    %36 = arith.shrsi %30, %35 : vector<1x128xi32>
    %37 = arith.sitofp %34 : vector<1x128xi32> to vector<1x128xf32>
    %38 = arith.addf %32, %37 : vector<1x128xf32>
    %c1_i32_14 = arith.constant 1 : i32
    %39 = vector.broadcast %c1_i32_14 : i32 to vector<1x128xi32>
    %40 = arith.andi %36, %39 : vector<1x128xi32>
    %c1_i32_15 = arith.constant 1 : i32
    %41 = vector.broadcast %c1_i32_15 : i32 to vector<1x128xi32>
    %42 = arith.shrsi %36, %41 : vector<1x128xi32>
    %43 = arith.sitofp %40 : vector<1x128xi32> to vector<1x128xf32>
    %44 = arith.addf %38, %43 : vector<1x128xf32>
    %c1_i32_16 = arith.constant 1 : i32
    %45 = vector.broadcast %c1_i32_16 : i32 to vector<1x128xi32>
    %46 = arith.andi %42, %45 : vector<1x128xi32>
    %47 = arith.sitofp %46 : vector<1x128xi32> to vector<1x128xf32>
    %48 = arith.addf %44, %47 : vector<1x128xf32>
    %49 = vector.extract_strided_slice %1 {offsets = [0, 0], sizes = [32, 1], strides = [1, 1]} : vector<32x2xf32> to vector<32x1xf32>
    %cst_17 = arith.constant 8.000000e+00 : f32
    %50 = vector.broadcast %cst_17 : f32 to vector<32x1xf32>
    %51 = arith.mulf %49, %50 : vector<32x1xf32>
    %52 = vector.shape_cast %51 : vector<32x1xf32> to vector<32x1xf32>
    %53 = vector.broadcast %52 : vector<32x1xf32> to vector<32x128xf32>
    %54 = vector.extract_strided_slice %1 {offsets = [0, 1], sizes = [32, 1], strides = [1, 1]} : vector<32x2xf32> to vector<32x1xf32>
    %55 = vector.extract_strided_slice %1 {offsets = [0, 0], sizes = [32, 1], strides = [1, 1]} : vector<32x2xf32> to vector<32x1xf32>
    %56 = arith.subf %54, %55 : vector<32x1xf32>
    %57 = vector.broadcast %56 : vector<32x1xf32> to vector<32x128xf32>
    %58 = vector.broadcast %48 : vector<1x128xf32> to vector<32x128xf32>
    %59 = arith.mulf %57, %58 : vector<32x128xf32>
    %60 = arith.addf %53, %59 : vector<32x128xf32>
    %61 = tpu.transpose %60, [1, 0] : vector<32x128xf32> -> vector<128x32xf32>
    %c0_18 = arith.constant 0 : index
    %c0_19 = arith.constant 0 : index
    %62 = vector.load %arg4[%c0_18, %c0_19] : memref<128x64xf32, #tpu.memory_space<vmem>>, vector<128x32xf32>
    tpu.vector_store %arg4[%c0_18, %c0_19], %61 {strides = array<i32>} : memref<128x64xf32, #tpu.memory_space<vmem>>, vector<128x32xf32>,
    %c0_20 = arith.constant 0 : index
    %c0_21 = arith.constant 0 : index
    %63 = vector.load %arg3[%c0_20, %c0_21] : memref<32x3xf32, #tpu.memory_space<vmem>>, vector<32x3xf32>
    %cst_22 = arith.constant 0.000000e+00 : f32
    %64 = vector.broadcast %cst_22 : f32 to vector<1x128xf32>
    %cst_23 = arith.constant 0.000000e+00 : f32
    %65 = vector.broadcast %cst_23 : f32 to vector<1x128xf32>
    %c3_i32 = arith.constant 3 : i32
    %66 = vector.broadcast %c3_i32 : i32 to vector<1x128xi32>
    %67 = arith.divsi %0, %66 : vector<1x128xi32>
    %c3_i32_24 = arith.constant 3 : i32
    %68 = vector.broadcast %c3_i32_24 : i32 to vector<1x128xi32>
    %69 = arith.muli %67, %68 : vector<1x128xi32>
    %70 = arith.subi %0, %69 : vector<1x128xi32>
    %c1_i32_25 = arith.constant 1 : i32
    %71 = vector.broadcast %c1_i32_25 : i32 to vector<1x128xi32>
    %72 = arith.cmpi eq, %70, %71 : vector<1x128xi32>
    %73 = arith.extui %72 : vector<1x128xi1> to vector<1x128xi32>
    %74 = arith.sitofp %73 : vector<1x128xi32> to vector<1x128xf32>
    %75 = arith.addf %64, %74 : vector<1x128xf32>
    %c2_i32 = arith.constant 2 : i32
    %76 = vector.broadcast %c2_i32 : i32 to vector<1x128xi32>
    %77 = arith.cmpi eq, %70, %76 : vector<1x128xi32>
    %78 = arith.extui %77 : vector<1x128xi1> to vector<1x128xi32>
    %79 = arith.sitofp %78 : vector<1x128xi32> to vector<1x128xf32>
    %80 = arith.addf %65, %79 : vector<1x128xf32>
    %c3_i32_26 = arith.constant 3 : i32
    %81 = vector.broadcast %c3_i32_26 : i32 to vector<1x128xi32>
    %82 = arith.divsi %67, %81 : vector<1x128xi32>
    %c3_i32_27 = arith.constant 3 : i32
    %83 = vector.broadcast %c3_i32_27 : i32 to vector<1x128xi32>
    %84 = arith.muli %82, %83 : vector<1x128xi32>
    %85 = arith.subi %67, %84 : vector<1x128xi32>
    %c1_i32_28 = arith.constant 1 : i32
    %86 = vector.broadcast %c1_i32_28 : i32 to vector<1x128xi32>
    %87 = arith.cmpi eq, %85, %86 : vector<1x128xi32>
    %88 = arith.extui %87 : vector<1x128xi1> to vector<1x128xi32>
    %89 = arith.sitofp %88 : vector<1x128xi32> to vector<1x128xf32>
    %90 = arith.addf %75, %89 : vector<1x128xf32>
    %c2_i32_29 = arith.constant 2 : i32
    %91 = vector.broadcast %c2_i32_29 : i32 to vector<1x128xi32>
    %92 = arith.cmpi eq, %85, %91 : vector<1x128xi32>
    %93 = arith.extui %92 : vector<1x128xi1> to vector<1x128xi32>
    %94 = arith.sitofp %93 : vector<1x128xi32> to vector<1x128xf32>
    %95 = arith.addf %80, %94 : vector<1x128xf32>
    %c3_i32_30 = arith.constant 3 : i32
    %96 = vector.broadcast %c3_i32_30 : i32 to vector<1x128xi32>
    %97 = arith.divsi %82, %96 : vector<1x128xi32>
    %c3_i32_31 = arith.constant 3 : i32
    %98 = vector.broadcast %c3_i32_31 : i32 to vector<1x128xi32>
    %99 = arith.muli %97, %98 : vector<1x128xi32>
    %100 = arith.subi %82, %99 : vector<1x128xi32>
    %c1_i32_32 = arith.constant 1 : i32
    %101 = vector.broadcast %c1_i32_32 : i32 to vector<1x128xi32>
    %102 = arith.cmpi eq, %100, %101 : vector<1x128xi32>
    %103 = arith.extui %102 : vector<1x128xi1> to vector<1x128xi32>
    %104 = arith.sitofp %103 : vector<1x128xi32> to vector<1x128xf32>
    %105 = arith.addf %90, %104 : vector<1x128xf32>
    %c2_i32_33 = arith.constant 2 : i32
    %106 = vector.broadcast %c2_i32_33 : i32 to vector<1x128xi32>
    %107 = arith.cmpi eq, %100, %106 : vector<1x128xi32>
    %108 = arith.extui %107 : vector<1x128xi1> to vector<1x128xi32>
    %109 = arith.sitofp %108 : vector<1x128xi32> to vector<1x128xf32>
    %110 = arith.addf %95, %109 : vector<1x128xf32>
    %c3_i32_34 = arith.constant 3 : i32
    %111 = vector.broadcast %c3_i32_34 : i32 to vector<1x128xi32>
    %112 = arith.divsi %97, %111 : vector<1x128xi32>
    %c3_i32_35 = arith.constant 3 : i32
    %113 = vector.broadcast %c3_i32_35 : i32 to vector<1x128xi32>
    %114 = arith.muli %112, %113 : vector<1x128xi32>
    %115 = arith.subi %97, %114 : vector<1x128xi32>
    %c1_i32_36 = arith.constant 1 : i32
    %116 = vector.broadcast %c1_i32_36 : i32 to vector<1x128xi32>
    %117 = arith.cmpi eq, %115, %116 : vector<1x128xi32>
    %118 = arith.extui %117 : vector<1x128xi1> to vector<1x128xi32>
    %119 = arith.sitofp %118 : vector<1x128xi32> to vector<1x128xf32>
    %120 = arith.addf %105, %119 : vector<1x128xf32>
    %c2_i32_37 = arith.constant 2 : i32
    %121 = vector.broadcast %c2_i32_37 : i32 to vector<1x128xi32>
    %122 = arith.cmpi eq, %115, %121 : vector<1x128xi32>
    %123 = arith.extui %122 : vector<1x128xi1> to vector<1x128xi32>
    %124 = arith.sitofp %123 : vector<1x128xi32> to vector<1x128xf32>
    %125 = arith.addf %110, %124 : vector<1x128xf32>
    %c3_i32_38 = arith.constant 3 : i32
    %126 = vector.broadcast %c3_i32_38 : i32 to vector<1x128xi32>
    %127 = arith.divsi %112, %126 : vector<1x128xi32>
    %c3_i32_39 = arith.constant 3 : i32
    %128 = vector.broadcast %c3_i32_39 : i32 to vector<1x128xi32>
    %129 = arith.muli %127, %128 : vector<1x128xi32>
    %130 = arith.subi %112, %129 : vector<1x128xi32>
    %c1_i32_40 = arith.constant 1 : i32
    %131 = vector.broadcast %c1_i32_40 : i32 to vector<1x128xi32>
    %132 = arith.cmpi eq, %130, %131 : vector<1x128xi32>
    %133 = arith.extui %132 : vector<1x128xi1> to vector<1x128xi32>
    %134 = arith.sitofp %133 : vector<1x128xi32> to vector<1x128xf32>
    %135 = arith.addf %120, %134 : vector<1x128xf32>
    %c2_i32_41 = arith.constant 2 : i32
    %136 = vector.broadcast %c2_i32_41 : i32 to vector<1x128xi32>
    %137 = arith.cmpi eq, %130, %136 : vector<1x128xi32>
    %138 = arith.extui %137 : vector<1x128xi1> to vector<1x128xi32>
    %139 = arith.sitofp %138 : vector<1x128xi32> to vector<1x128xf32>
    %140 = arith.addf %125, %139 : vector<1x128xf32>
    %c3_i32_42 = arith.constant 3 : i32
    %141 = vector.broadcast %c3_i32_42 : i32 to vector<1x128xi32>
    %142 = arith.divsi %127, %141 : vector<1x128xi32>
    %c3_i32_43 = arith.constant 3 : i32
    %143 = vector.broadcast %c3_i32_43 : i32 to vector<1x128xi32>
    %144 = arith.muli %142, %143 : vector<1x128xi32>
    %145 = arith.subi %127, %144 : vector<1x128xi32>
    %c1_i32_44 = arith.constant 1 : i32
    %146 = vector.broadcast %c1_i32_44 : i32 to vector<1x128xi32>
    %147 = arith.cmpi eq, %145, %146 : vector<1x128xi32>
    %148 = arith.extui %147 : vector<1x128xi1> to vector<1x128xi32>
    %149 = arith.sitofp %148 : vector<1x128xi32> to vector<1x128xf32>
    %150 = arith.addf %135, %149 : vector<1x128xf32>
    %c2_i32_45 = arith.constant 2 : i32
    %151 = vector.broadcast %c2_i32_45 : i32 to vector<1x128xi32>
    %152 = arith.cmpi eq, %145, %151 : vector<1x128xi32>
    %153 = arith.extui %152 : vector<1x128xi1> to vector<1x128xi32>
    %154 = arith.sitofp %153 : vector<1x128xi32> to vector<1x128xf32>
    %155 = arith.addf %140, %154 : vector<1x128xf32>
    %c3_i32_46 = arith.constant 3 : i32
    %156 = vector.broadcast %c3_i32_46 : i32 to vector<1x128xi32>
    %157 = arith.divsi %142, %156 : vector<1x128xi32>
    %c3_i32_47 = arith.constant 3 : i32
    %158 = vector.broadcast %c3_i32_47 : i32 to vector<1x128xi32>
    %159 = arith.muli %157, %158 : vector<1x128xi32>
    %160 = arith.subi %142, %159 : vector<1x128xi32>
    %c1_i32_48 = arith.constant 1 : i32
    %161 = vector.broadcast %c1_i32_48 : i32 to vector<1x128xi32>
    %162 = arith.cmpi eq, %160, %161 : vector<1x128xi32>
    %163 = arith.extui %162 : vector<1x128xi1> to vector<1x128xi32>
    %164 = arith.sitofp %163 : vector<1x128xi32> to vector<1x128xf32>
    %165 = arith.addf %150, %164 : vector<1x128xf32>
    %c2_i32_49 = arith.constant 2 : i32
    %166 = vector.broadcast %c2_i32_49 : i32 to vector<1x128xi32>
    %167 = arith.cmpi eq, %160, %166 : vector<1x128xi32>
    %168 = arith.extui %167 : vector<1x128xi1> to vector<1x128xi32>
    %169 = arith.sitofp %168 : vector<1x128xi32> to vector<1x128xf32>
    %170 = arith.addf %155, %169 : vector<1x128xf32>
    %c3_i32_50 = arith.constant 3 : i32
    %171 = vector.broadcast %c3_i32_50 : i32 to vector<1x128xi32>
    %172 = arith.divsi %157, %171 : vector<1x128xi32>
    %c3_i32_51 = arith.constant 3 : i32
    %173 = vector.broadcast %c3_i32_51 : i32 to vector<1x128xi32>
    %174 = arith.muli %172, %173 : vector<1x128xi32>
    %175 = arith.subi %157, %174 : vector<1x128xi32>
    %c1_i32_52 = arith.constant 1 : i32
    %176 = vector.broadcast %c1_i32_52 : i32 to vector<1x128xi32>
    %177 = arith.cmpi eq, %175, %176 : vector<1x128xi32>
    %178 = arith.extui %177 : vector<1x128xi1> to vector<1x128xi32>
    %179 = arith.sitofp %178 : vector<1x128xi32> to vector<1x128xf32>
    %180 = arith.addf %165, %179 : vector<1x128xf32>
    %c2_i32_53 = arith.constant 2 : i32
    %181 = vector.broadcast %c2_i32_53 : i32 to vector<1x128xi32>
    %182 = arith.cmpi eq, %175, %181 : vector<1x128xi32>
    %183 = arith.extui %182 : vector<1x128xi1> to vector<1x128xi32>
    %184 = arith.sitofp %183 : vector<1x128xi32> to vector<1x128xf32>
    %185 = arith.addf %170, %184 : vector<1x128xf32>
    %186 = vector.extract_strided_slice %63 {offsets = [0, 0], sizes = [32, 1], strides = [1, 1]} : vector<32x3xf32> to vector<32x1xf32>
    %cst_54 = arith.constant 8.000000e+00 : f32
    %187 = vector.broadcast %cst_54 : f32 to vector<32x1xf32>
    %188 = arith.mulf %186, %187 : vector<32x1xf32>
    %189 = vector.shape_cast %188 : vector<32x1xf32> to vector<32x1xf32>
    %190 = vector.broadcast %189 : vector<32x1xf32> to vector<32x128xf32>
    %191 = vector.extract_strided_slice %63 {offsets = [0, 1], sizes = [32, 1], strides = [1, 1]} : vector<32x3xf32> to vector<32x1xf32>
    %192 = vector.extract_strided_slice %63 {offsets = [0, 0], sizes = [32, 1], strides = [1, 1]} : vector<32x3xf32> to vector<32x1xf32>
    %193 = arith.subf %191, %192 : vector<32x1xf32>
    %194 = vector.broadcast %193 : vector<32x1xf32> to vector<32x128xf32>
    %195 = vector.broadcast %180 : vector<1x128xf32> to vector<32x128xf32>
    %196 = arith.mulf %194, %195 : vector<32x128xf32>
    %197 = arith.addf %190, %196 : vector<32x128xf32>
    %198 = vector.extract_strided_slice %63 {offsets = [0, 2], sizes = [32, 1], strides = [1, 1]} : vector<32x3xf32> to vector<32x1xf32>
    %199 = vector.extract_strided_slice %63 {offsets = [0, 0], sizes = [32, 1], strides = [1, 1]} : vector<32x3xf32> to vector<32x1xf32>
    %200 = arith.subf %198, %199 : vector<32x1xf32>
    %201 = vector.broadcast %200 : vector<32x1xf32> to vector<32x128xf32>
    %202 = vector.broadcast %185 : vector<1x128xf32> to vector<32x128xf32>
    %203 = arith.mulf %201, %202 : vector<32x128xf32>
    %204 = arith.addf %197, %203 : vector<32x128xf32>
    %205 = tpu.transpose %204, [1, 0] : vector<32x128xf32> -> vector<128x32xf32>
    %c0_55 = arith.constant 0 : index
    %c32 = arith.constant 32 : index
    %206 = vector.load %arg4[%c0_55, %c32] : memref<128x64xf32, #tpu.memory_space<vmem>>, vector<128x32xf32>
    tpu.vector_store %arg4[%c0_55, %c32], %205 {strides = array<i32>} : memref<128x64xf32, #tpu.memory_space<vmem>>, vector<128x32xf32>,
    return
  }
  func.func @transform_0(%arg0: i32) -> (i32, i32) {
    %c0_i32 = arith.constant 0 : i32
    %c0_i32_0 = arith.constant 0 : i32
    return %c0_i32, %arg0 : i32, i32
  }
  func.func @transform_1(%arg0: i32) -> (i32, i32) {
    %c0_i32 = arith.constant 0 : i32
    %c0_i32_0 = arith.constant 0 : i32
    %c0_i32_1 = arith.constant 0 : i32
    return %c0_i32, %c0_i32_0 : i32, i32
  }
  func.func @transform_2(%arg0: i32) -> (i32, i32) {
    %c0_i32 = arith.constant 0 : i32
    %c0_i32_0 = arith.constant 0 : i32
    %c0_i32_1 = arith.constant 0 : i32
    return %c0_i32, %c0_i32_0 : i32, i32
  }
  func.func @transform_3(%arg0: i32) -> (i32, i32) {
    %c0_i32 = arith.constant 0 : i32
    %c0_i32_0 = arith.constant 0 : i32
    return %arg0, %c0_i32 : i32, i32
  }
}

module attributes {stable_mosaic.version = 11 : i64} {
  func.func @kernel(%arg0: i32, %arg1: memref<1x128xi32, #tpu.memory_space<vmem>>, %arg2: memref<32x2xf32, #tpu.memory_space<vmem>>, %arg3: memref<32x3xf32, #tpu.memory_space<vmem>>, %arg4: memref<64x128xf32, #tpu.memory_space<vmem>>) attributes {dimension_semantics = [#tpu.dimension_semantics<parallel>], iteration_bounds = array<i64: 2>, scalar_prefetch = 0 : i64, scratch_operands = 0 : i64, tpu.core_type = #tpu.core_type<tc>, window_params = [{transform_indices = @transform_0, window_bounds = array<i64: 1, 128>}, {pipeline_mode = #tpu.pipeline_mode<synchronous>, transform_indices = @transform_1, window_bounds = array<i64: 32, 2>}, {pipeline_mode = #tpu.pipeline_mode<synchronous>, transform_indices = @transform_2, window_bounds = array<i64: 32, 3>}, {transform_indices = @transform_3, window_bounds = array<i64: 64, 128>}]} {
    %c0 = arith.constant 0 : index
    %c0_0 = arith.constant 0 : index
    %0 = vector.load %arg1[%c0, %c0_0] : memref<1x128xi32, #tpu.memory_space<vmem>>, vector<1x128xi32>
    %c0_1 = arith.constant 0 : index
    %c0_2 = arith.constant 0 : index
    %1 = vector.load %arg2[%c0_1, %c0_2] : memref<32x2xf32, #tpu.memory_space<vmem>>, vector<32x2xf32>
    %cst = arith.constant 0.000000e+00 : f32
    %2 = vector.broadcast %cst : f32 to vector<1x128xf32>
    %c1_i32 = arith.constant 1 : i32
    %3 = vector.broadcast %c1_i32 : i32 to vector<1x128xi32>
    %4 = arith.andi %0, %3 : vector<1x128xi32>
    %c1_i32_3 = arith.constant 1 : i32
    %5 = vector.broadcast %c1_i32_3 : i32 to vector<1x128xi32>
    %6 = arith.shrsi %0, %5 : vector<1x128xi32>
    %7 = arith.sitofp %4 : vector<1x128xi32> to vector<1x128xf32>
    %8 = arith.addf %2, %7 : vector<1x128xf32>
    %c1_i32_4 = arith.constant 1 : i32
    %9 = vector.broadcast %c1_i32_4 : i32 to vector<1x128xi32>
    %10 = arith.andi %6, %9 : vector<1x128xi32>
    %c1_i32_5 = arith.constant 1 : i32
    %11 = vector.broadcast %c1_i32_5 : i32 to vector<1x128xi32>
    %12 = arith.shrsi %6, %11 : vector<1x128xi32>
    %13 = arith.sitofp %10 : vector<1x128xi32> to vector<1x128xf32>
    %14 = arith.addf %8, %13 : vector<1x128xf32>
    %c1_i32_6 = arith.constant 1 : i32
    %15 = vector.broadcast %c1_i32_6 : i32 to vector<1x128xi32>
    %16 = arith.andi %12, %15 : vector<1x128xi32>
    %c1_i32_7 = arith.constant 1 : i32
    %17 = vector.broadcast %c1_i32_7 : i32 to vector<1x128xi32>
    %18 = arith.shrsi %12, %17 : vector<1x128xi32>
    %19 = arith.sitofp %16 : vector<1x128xi32> to vector<1x128xf32>
    %20 = arith.addf %14, %19 : vector<1x128xf32>
    %c1_i32_8 = arith.constant 1 : i32
    %21 = vector.broadcast %c1_i32_8 : i32 to vector<1x128xi32>
    %22 = arith.andi %18, %21 : vector<1x128xi32>
    %c1_i32_9 = arith.constant 1 : i32
    %23 = vector.broadcast %c1_i32_9 : i32 to vector<1x128xi32>
    %24 = arith.shrsi %18, %23 : vector<1x128xi32>
    %25 = arith.sitofp %22 : vector<1x128xi32> to vector<1x128xf32>
    %26 = arith.addf %20, %25 : vector<1x128xf32>
    %c1_i32_10 = arith.constant 1 : i32
    %27 = vector.broadcast %c1_i32_10 : i32 to vector<1x128xi32>
    %28 = arith.andi %24, %27 : vector<1x128xi32>
    %c1_i32_11 = arith.constant 1 : i32
    %29 = vector.broadcast %c1_i32_11 : i32 to vector<1x128xi32>
    %30 = arith.shrsi %24, %29 : vector<1x128xi32>
    %31 = arith.sitofp %28 : vector<1x128xi32> to vector<1x128xf32>
    %32 = arith.addf %26, %31 : vector<1x128xf32>
    %c1_i32_12 = arith.constant 1 : i32
    %33 = vector.broadcast %c1_i32_12 : i32 to vector<1x128xi32>
    %34 = arith.andi %30, %33 : vector<1x128xi32>
    %c1_i32_13 = arith.constant 1 : i32
    %35 = vector.broadcast %c1_i32_13 : i32 to vector<1x128xi32>
    %36 = arith.shrsi %30, %35 : vector<1x128xi32>
    %37 = arith.sitofp %34 : vector<1x128xi32> to vector<1x128xf32>
    %38 = arith.addf %32, %37 : vector<1x128xf32>
    %c1_i32_14 = arith.constant 1 : i32
    %39 = vector.broadcast %c1_i32_14 : i32 to vector<1x128xi32>
    %40 = arith.andi %36, %39 : vector<1x128xi32>
    %c1_i32_15 = arith.constant 1 : i32
    %41 = vector.broadcast %c1_i32_15 : i32 to vector<1x128xi32>
    %42 = arith.shrsi %36, %41 : vector<1x128xi32>
    %43 = arith.sitofp %40 : vector<1x128xi32> to vector<1x128xf32>
    %44 = arith.addf %38, %43 : vector<1x128xf32>
    %c1_i32_16 = arith.constant 1 : i32
    %45 = vector.broadcast %c1_i32_16 : i32 to vector<1x128xi32>
    %46 = arith.andi %42, %45 : vector<1x128xi32>
    %47 = arith.sitofp %46 : vector<1x128xi32> to vector<1x128xf32>
    %48 = arith.addf %44, %47 : vector<1x128xf32>
    %49 = vector.extract_strided_slice %1 {offsets = [0, 0], sizes = [32, 1], strides = [1, 1]} : vector<32x2xf32> to vector<32x1xf32>
    %cst_17 = arith.constant 8.000000e+00 : f32
    %50 = vector.broadcast %cst_17 : f32 to vector<32x1xf32>
    %51 = arith.mulf %49, %50 : vector<32x1xf32>
    %52 = vector.shape_cast %51 : vector<32x1xf32> to vector<32x1xf32>
    %53 = vector.broadcast %52 : vector<32x1xf32> to vector<32x128xf32>
    %54 = vector.extract_strided_slice %1 {offsets = [0, 1], sizes = [32, 1], strides = [1, 1]} : vector<32x2xf32> to vector<32x1xf32>
    %55 = vector.extract_strided_slice %1 {offsets = [0, 0], sizes = [32, 1], strides = [1, 1]} : vector<32x2xf32> to vector<32x1xf32>
    %56 = arith.subf %54, %55 : vector<32x1xf32>
    %57 = vector.broadcast %56 : vector<32x1xf32> to vector<32x128xf32>
    %58 = vector.broadcast %48 : vector<1x128xf32> to vector<32x128xf32>
    %59 = arith.mulf %57, %58 : vector<32x128xf32>
    %60 = arith.addf %53, %59 : vector<32x128xf32>
    %c0_18 = arith.constant 0 : index
    %c0_19 = arith.constant 0 : index
    %61 = vector.load %arg4[%c0_18, %c0_19] : memref<64x128xf32, #tpu.memory_space<vmem>>, vector<32x128xf32>
    tpu.vector_store %arg4[%c0_18, %c0_19], %60 {strides = array<i32>} : memref<64x128xf32, #tpu.memory_space<vmem>>, vector<32x128xf32>,
    %c0_20 = arith.constant 0 : index
    %c0_21 = arith.constant 0 : index
    %62 = vector.load %arg3[%c0_20, %c0_21] : memref<32x3xf32, #tpu.memory_space<vmem>>, vector<32x3xf32>
    %cst_22 = arith.constant 0.000000e+00 : f32
    %63 = vector.broadcast %cst_22 : f32 to vector<1x128xf32>
    %cst_23 = arith.constant 0.000000e+00 : f32
    %64 = vector.broadcast %cst_23 : f32 to vector<1x128xf32>
    %c3_i32 = arith.constant 3 : i32
    %65 = vector.broadcast %c3_i32 : i32 to vector<1x128xi32>
    %66 = arith.divsi %0, %65 : vector<1x128xi32>
    %c3_i32_24 = arith.constant 3 : i32
    %67 = vector.broadcast %c3_i32_24 : i32 to vector<1x128xi32>
    %68 = arith.muli %66, %67 : vector<1x128xi32>
    %69 = arith.subi %0, %68 : vector<1x128xi32>
    %c1_i32_25 = arith.constant 1 : i32
    %70 = vector.broadcast %c1_i32_25 : i32 to vector<1x128xi32>
    %71 = arith.cmpi eq, %69, %70 : vector<1x128xi32>
    %72 = arith.extui %71 : vector<1x128xi1> to vector<1x128xi32>
    %73 = arith.sitofp %72 : vector<1x128xi32> to vector<1x128xf32>
    %74 = arith.addf %63, %73 : vector<1x128xf32>
    %c2_i32 = arith.constant 2 : i32
    %75 = vector.broadcast %c2_i32 : i32 to vector<1x128xi32>
    %76 = arith.cmpi eq, %69, %75 : vector<1x128xi32>
    %77 = arith.extui %76 : vector<1x128xi1> to vector<1x128xi32>
    %78 = arith.sitofp %77 : vector<1x128xi32> to vector<1x128xf32>
    %79 = arith.addf %64, %78 : vector<1x128xf32>
    %c3_i32_26 = arith.constant 3 : i32
    %80 = vector.broadcast %c3_i32_26 : i32 to vector<1x128xi32>
    %81 = arith.divsi %66, %80 : vector<1x128xi32>
    %c3_i32_27 = arith.constant 3 : i32
    %82 = vector.broadcast %c3_i32_27 : i32 to vector<1x128xi32>
    %83 = arith.muli %81, %82 : vector<1x128xi32>
    %84 = arith.subi %66, %83 : vector<1x128xi32>
    %c1_i32_28 = arith.constant 1 : i32
    %85 = vector.broadcast %c1_i32_28 : i32 to vector<1x128xi32>
    %86 = arith.cmpi eq, %84, %85 : vector<1x128xi32>
    %87 = arith.extui %86 : vector<1x128xi1> to vector<1x128xi32>
    %88 = arith.sitofp %87 : vector<1x128xi32> to vector<1x128xf32>
    %89 = arith.addf %74, %88 : vector<1x128xf32>
    %c2_i32_29 = arith.constant 2 : i32
    %90 = vector.broadcast %c2_i32_29 : i32 to vector<1x128xi32>
    %91 = arith.cmpi eq, %84, %90 : vector<1x128xi32>
    %92 = arith.extui %91 : vector<1x128xi1> to vector<1x128xi32>
    %93 = arith.sitofp %92 : vector<1x128xi32> to vector<1x128xf32>
    %94 = arith.addf %79, %93 : vector<1x128xf32>
    %c3_i32_30 = arith.constant 3 : i32
    %95 = vector.broadcast %c3_i32_30 : i32 to vector<1x128xi32>
    %96 = arith.divsi %81, %95 : vector<1x128xi32>
    %c3_i32_31 = arith.constant 3 : i32
    %97 = vector.broadcast %c3_i32_31 : i32 to vector<1x128xi32>
    %98 = arith.muli %96, %97 : vector<1x128xi32>
    %99 = arith.subi %81, %98 : vector<1x128xi32>
    %c1_i32_32 = arith.constant 1 : i32
    %100 = vector.broadcast %c1_i32_32 : i32 to vector<1x128xi32>
    %101 = arith.cmpi eq, %99, %100 : vector<1x128xi32>
    %102 = arith.extui %101 : vector<1x128xi1> to vector<1x128xi32>
    %103 = arith.sitofp %102 : vector<1x128xi32> to vector<1x128xf32>
    %104 = arith.addf %89, %103 : vector<1x128xf32>
    %c2_i32_33 = arith.constant 2 : i32
    %105 = vector.broadcast %c2_i32_33 : i32 to vector<1x128xi32>
    %106 = arith.cmpi eq, %99, %105 : vector<1x128xi32>
    %107 = arith.extui %106 : vector<1x128xi1> to vector<1x128xi32>
    %108 = arith.sitofp %107 : vector<1x128xi32> to vector<1x128xf32>
    %109 = arith.addf %94, %108 : vector<1x128xf32>
    %c3_i32_34 = arith.constant 3 : i32
    %110 = vector.broadcast %c3_i32_34 : i32 to vector<1x128xi32>
    %111 = arith.divsi %96, %110 : vector<1x128xi32>
    %c3_i32_35 = arith.constant 3 : i32
    %112 = vector.broadcast %c3_i32_35 : i32 to vector<1x128xi32>
    %113 = arith.muli %111, %112 : vector<1x128xi32>
    %114 = arith.subi %96, %113 : vector<1x128xi32>
    %c1_i32_36 = arith.constant 1 : i32
    %115 = vector.broadcast %c1_i32_36 : i32 to vector<1x128xi32>
    %116 = arith.cmpi eq, %114, %115 : vector<1x128xi32>
    %117 = arith.extui %116 : vector<1x128xi1> to vector<1x128xi32>
    %118 = arith.sitofp %117 : vector<1x128xi32> to vector<1x128xf32>
    %119 = arith.addf %104, %118 : vector<1x128xf32>
    %c2_i32_37 = arith.constant 2 : i32
    %120 = vector.broadcast %c2_i32_37 : i32 to vector<1x128xi32>
    %121 = arith.cmpi eq, %114, %120 : vector<1x128xi32>
    %122 = arith.extui %121 : vector<1x128xi1> to vector<1x128xi32>
    %123 = arith.sitofp %122 : vector<1x128xi32> to vector<1x128xf32>
    %124 = arith.addf %109, %123 : vector<1x128xf32>
    %c3_i32_38 = arith.constant 3 : i32
    %125 = vector.broadcast %c3_i32_38 : i32 to vector<1x128xi32>
    %126 = arith.divsi %111, %125 : vector<1x128xi32>
    %c3_i32_39 = arith.constant 3 : i32
    %127 = vector.broadcast %c3_i32_39 : i32 to vector<1x128xi32>
    %128 = arith.muli %126, %127 : vector<1x128xi32>
    %129 = arith.subi %111, %128 : vector<1x128xi32>
    %c1_i32_40 = arith.constant 1 : i32
    %130 = vector.broadcast %c1_i32_40 : i32 to vector<1x128xi32>
    %131 = arith.cmpi eq, %129, %130 : vector<1x128xi32>
    %132 = arith.extui %131 : vector<1x128xi1> to vector<1x128xi32>
    %133 = arith.sitofp %132 : vector<1x128xi32> to vector<1x128xf32>
    %134 = arith.addf %119, %133 : vector<1x128xf32>
    %c2_i32_41 = arith.constant 2 : i32
    %135 = vector.broadcast %c2_i32_41 : i32 to vector<1x128xi32>
    %136 = arith.cmpi eq, %129, %135 : vector<1x128xi32>
    %137 = arith.extui %136 : vector<1x128xi1> to vector<1x128xi32>
    %138 = arith.sitofp %137 : vector<1x128xi32> to vector<1x128xf32>
    %139 = arith.addf %124, %138 : vector<1x128xf32>
    %c3_i32_42 = arith.constant 3 : i32
    %140 = vector.broadcast %c3_i32_42 : i32 to vector<1x128xi32>
    %141 = arith.divsi %126, %140 : vector<1x128xi32>
    %c3_i32_43 = arith.constant 3 : i32
    %142 = vector.broadcast %c3_i32_43 : i32 to vector<1x128xi32>
    %143 = arith.muli %141, %142 : vector<1x128xi32>
    %144 = arith.subi %126, %143 : vector<1x128xi32>
    %c1_i32_44 = arith.constant 1 : i32
    %145 = vector.broadcast %c1_i32_44 : i32 to vector<1x128xi32>
    %146 = arith.cmpi eq, %144, %145 : vector<1x128xi32>
    %147 = arith.extui %146 : vector<1x128xi1> to vector<1x128xi32>
    %148 = arith.sitofp %147 : vector<1x128xi32> to vector<1x128xf32>
    %149 = arith.addf %134, %148 : vector<1x128xf32>
    %c2_i32_45 = arith.constant 2 : i32
    %150 = vector.broadcast %c2_i32_45 : i32 to vector<1x128xi32>
    %151 = arith.cmpi eq, %144, %150 : vector<1x128xi32>
    %152 = arith.extui %151 : vector<1x128xi1> to vector<1x128xi32>
    %153 = arith.sitofp %152 : vector<1x128xi32> to vector<1x128xf32>
    %154 = arith.addf %139, %153 : vector<1x128xf32>
    %c3_i32_46 = arith.constant 3 : i32
    %155 = vector.broadcast %c3_i32_46 : i32 to vector<1x128xi32>
    %156 = arith.divsi %141, %155 : vector<1x128xi32>
    %c3_i32_47 = arith.constant 3 : i32
    %157 = vector.broadcast %c3_i32_47 : i32 to vector<1x128xi32>
    %158 = arith.muli %156, %157 : vector<1x128xi32>
    %159 = arith.subi %141, %158 : vector<1x128xi32>
    %c1_i32_48 = arith.constant 1 : i32
    %160 = vector.broadcast %c1_i32_48 : i32 to vector<1x128xi32>
    %161 = arith.cmpi eq, %159, %160 : vector<1x128xi32>
    %162 = arith.extui %161 : vector<1x128xi1> to vector<1x128xi32>
    %163 = arith.sitofp %162 : vector<1x128xi32> to vector<1x128xf32>
    %164 = arith.addf %149, %163 : vector<1x128xf32>
    %c2_i32_49 = arith.constant 2 : i32
    %165 = vector.broadcast %c2_i32_49 : i32 to vector<1x128xi32>
    %166 = arith.cmpi eq, %159, %165 : vector<1x128xi32>
    %167 = arith.extui %166 : vector<1x128xi1> to vector<1x128xi32>
    %168 = arith.sitofp %167 : vector<1x128xi32> to vector<1x128xf32>
    %169 = arith.addf %154, %168 : vector<1x128xf32>
    %c3_i32_50 = arith.constant 3 : i32
    %170 = vector.broadcast %c3_i32_50 : i32 to vector<1x128xi32>
    %171 = arith.divsi %156, %170 : vector<1x128xi32>
    %c3_i32_51 = arith.constant 3 : i32
    %172 = vector.broadcast %c3_i32_51 : i32 to vector<1x128xi32>
    %173 = arith.muli %171, %172 : vector<1x128xi32>
    %174 = arith.subi %156, %173 : vector<1x128xi32>
    %c1_i32_52 = arith.constant 1 : i32
    %175 = vector.broadcast %c1_i32_52 : i32 to vector<1x128xi32>
    %176 = arith.cmpi eq, %174, %175 : vector<1x128xi32>
    %177 = arith.extui %176 : vector<1x128xi1> to vector<1x128xi32>
    %178 = arith.sitofp %177 : vector<1x128xi32> to vector<1x128xf32>
    %179 = arith.addf %164, %178 : vector<1x128xf32>
    %c2_i32_53 = arith.constant 2 : i32
    %180 = vector.broadcast %c2_i32_53 : i32 to vector<1x128xi32>
    %181 = arith.cmpi eq, %174, %180 : vector<1x128xi32>
    %182 = arith.extui %181 : vector<1x128xi1> to vector<1x128xi32>
    %183 = arith.sitofp %182 : vector<1x128xi32> to vector<1x128xf32>
    %184 = arith.addf %169, %183 : vector<1x128xf32>
    %185 = vector.extract_strided_slice %62 {offsets = [0, 0], sizes = [32, 1], strides = [1, 1]} : vector<32x3xf32> to vector<32x1xf32>
    %cst_54 = arith.constant 8.000000e+00 : f32
    %186 = vector.broadcast %cst_54 : f32 to vector<32x1xf32>
    %187 = arith.mulf %185, %186 : vector<32x1xf32>
    %188 = vector.shape_cast %187 : vector<32x1xf32> to vector<32x1xf32>
    %189 = vector.broadcast %188 : vector<32x1xf32> to vector<32x128xf32>
    %190 = vector.extract_strided_slice %62 {offsets = [0, 1], sizes = [32, 1], strides = [1, 1]} : vector<32x3xf32> to vector<32x1xf32>
    %191 = vector.extract_strided_slice %62 {offsets = [0, 0], sizes = [32, 1], strides = [1, 1]} : vector<32x3xf32> to vector<32x1xf32>
    %192 = arith.subf %190, %191 : vector<32x1xf32>
    %193 = vector.broadcast %192 : vector<32x1xf32> to vector<32x128xf32>
    %194 = vector.broadcast %179 : vector<1x128xf32> to vector<32x128xf32>
    %195 = arith.mulf %193, %194 : vector<32x128xf32>
    %196 = arith.addf %189, %195 : vector<32x128xf32>
    %197 = vector.extract_strided_slice %62 {offsets = [0, 2], sizes = [32, 1], strides = [1, 1]} : vector<32x3xf32> to vector<32x1xf32>
    %198 = vector.extract_strided_slice %62 {offsets = [0, 0], sizes = [32, 1], strides = [1, 1]} : vector<32x3xf32> to vector<32x1xf32>
    %199 = arith.subf %197, %198 : vector<32x1xf32>
    %200 = vector.broadcast %199 : vector<32x1xf32> to vector<32x128xf32>
    %201 = vector.broadcast %184 : vector<1x128xf32> to vector<32x128xf32>
    %202 = arith.mulf %200, %201 : vector<32x128xf32>
    %203 = arith.addf %196, %202 : vector<32x128xf32>
    %c32 = arith.constant 32 : index
    %c0_55 = arith.constant 0 : index
    %204 = vector.load %arg4[%c32, %c0_55] : memref<64x128xf32, #tpu.memory_space<vmem>>, vector<32x128xf32>
    tpu.vector_store %arg4[%c32, %c0_55], %203 {strides = array<i32>} : memref<64x128xf32, #tpu.memory_space<vmem>>, vector<32x128xf32>,
    return
  }
  func.func @transform_0(%arg0: i32) -> (i32, i32) {
    %c0_i32 = arith.constant 0 : i32
    %c0_i32_0 = arith.constant 0 : i32
    return %c0_i32, %arg0 : i32, i32
  }
  func.func @transform_1(%arg0: i32) -> (i32, i32) {
    %c0_i32 = arith.constant 0 : i32
    %c0_i32_0 = arith.constant 0 : i32
    %c0_i32_1 = arith.constant 0 : i32
    return %c0_i32, %c0_i32_0 : i32, i32
  }
  func.func @transform_2(%arg0: i32) -> (i32, i32) {
    %c0_i32 = arith.constant 0 : i32
    %c0_i32_0 = arith.constant 0 : i32
    %c0_i32_1 = arith.constant 0 : i32
    return %c0_i32, %c0_i32_0 : i32, i32
  }
  func.func @transform_3(%arg0: i32) -> (i32, i32) {
    %c0_i32 = arith.constant 0 : i32
    %c0_i32_0 = arith.constant 0 : i32
    return %c0_i32, %arg0 : i32, i32
  }
}

</mosaic_0001>

<llo_original>
// kernel: tpu_custom_call.1
$region0: #{tpu_custom_call.1}
  #allocation0 [shape = 'u32[]', space=smem, size = 0x4, offset = 0x4, fixed_abs, tag = 'smem constant byte address 0x4 - core index']
  #allocation1 [shape = 'u32[144,128]{1,0:T(1,128)}', space=vmem, size = 0x12000, scoped, tag = 'internal scratch']
  %s0 = inlined_call_operand.vmem [shape: s32[1,256], index: 0, kind: input, shape index: {}]
  %s1 = inlined_call_operand.vmem [shape: f32[32,2], index: 1, kind: input, shape index: {}]
  %s2 = inlined_call_operand.vmem [shape: f32[32,3], index: 2, kind: input, shape index: {}]
  %s3 = inlined_call_operand.vmem [shape: f32[256,64], index: 3, kind: output, shape index: {}]
  %s4 = sld [smem:[#allocation0]]
  $region45: #{tpu_custom_call.1} parent=0
    _
  %s6 = ssub.s32 1, %s4
  %s7 = scalar_select 0, %s6, %s4
  loop: start=0, step=1, limit=4
  $region2: #{tpu_custom_call.1} parent=0 // loop_pre_header
    _
  $region3: #{tpu_custom_call.1} parent=0 // loop_header
    %s9 = sphi 0, %s13
    %p10 = scmp.ge.s32.totalorder %s9, 4
    %s19 = sphi 0, %s21
    %s22 = sphi 0, %s19
    %s23 = sphi 0, %s22
    %s39 = sphi 0, %s23
    %s43 = sphi 0, %s43
    %s45 = sphi 0, %s43
    %s46 = sphi 0, %s45
    %s60 = sphi 0, %s46
    %s64 = sphi 0, %s64
    %s66 = sphi 0, %s64
    %s67 = sphi 0, %s66
    %s81 = sphi 0, %s67
    %s87 = sphi 0, %s89
    %s90 = sphi 0, %s87
    %s91 = sphi 0, %s90
    %s107 = sphi 0, %s91
  $region4: #{tpu_custom_call.1} parent=0 // loop_header_branch
    %12 = sbr.rel (%p10) target = $region8
  $region5: #{tpu_custom_call.1} parent=0 // loop_body
    %s14 = ssub.s32 %s9, 1
    %s15 = ssub.s32 %s9, 2
    %s16 = sadd.s32 %s9, 1
    %s17 = ssub.s32 %s9, %s16
    %p18 = scmp.eq.s32.totalorder %s17, 0
    %s20 = sadd.s32 %s19, 1
    %s21 = scalar_select %p18, %s19, %s20
    %p24 = pneg %p18
    %p25 = scmp.eq.s32.totalorder %s9, 1
    %p26 = por %p24, %p25
    %p27 = scmp.ne.s32.totalorder %s19, %s22
    %p28 = scmp.eq.s32.totalorder %s9, 0
    %p29 = por %p27, %p28
    %p30 = scmp.ne.s32.totalorder %s19, %s22
    %p31 = scmp.eq.s32.totalorder %s14, 1
    %p32 = por %p30, %p31
    %p33 = scmp.ne.s32.totalorder %s22, %s23
    %p34 = scmp.eq.s32.totalorder %s14, 0
    %p35 = por %p33, %p34
    %p36 = scmp.ne.s32.totalorder %s22, %s23
    %p37 = scmp.eq.s32.totalorder %s15, 1
    %p38 = por %p36, %p37
    %p40 = scmp.ne.s32.totalorder %s23, %s39
    %p41 = scmp.eq.s32.totalorder %s15, 0
    %p42 = por %p40, %p41
    %s44 = sadd.s32 %s43, 1
    %p47 = scmp.eq.s32.totalorder %s9, 1
    %p48 = scmp.ne.s32.totalorder %s43, %s45
    %p49 = scmp.eq.s32.totalorder %s9, 0
    %p50 = por %p48, %p49
    %p51 = scmp.ne.s32.totalorder %s43, %s45
    %p52 = scmp.eq.s32.totalorder %s14, 1
    %p53 = por %p51, %p52
    %p54 = scmp.ne.s32.totalorder %s45, %s46
    %p55 = scmp.eq.s32.totalorder %s14, 0
    %p56 = por %p54, %p55
    %p57 = scmp.ne.s32.totalorder %s45, %s46
    %p58 = scmp.eq.s32.totalorder %s15, 1
    %p59 = por %p57, %p58
    %p61 = scmp.ne.s32.totalorder %s46, %s60
    %p62 = scmp.eq.s32.totalorder %s15, 0
    %p63 = por %p61, %p62
    %s65 = sadd.s32 %s64, 1
    %p68 = scmp.eq.s32.totalorder %s9, 1
    %p69 = scmp.ne.s32.totalorder %s64, %s66
    %p70 = scmp.eq.s32.totalorder %s9, 0
    %p71 = por %p69, %p70
    %p72 = scmp.ne.s32.totalorder %s64, %s66
    %p73 = scmp.eq.s32.totalorder %s14, 1
    %p74 = por %p72, %p73
    %p75 = scmp.ne.s32.totalorder %s66, %s67
    %p76 = scmp.eq.s32.totalorder %s14, 0
    %p77 = por %p75, %p76
    %p78 = scmp.ne.s32.totalorder %s66, %s67
    %p79 = scmp.eq.s32.totalorder %s15, 1
    %p80 = por %p78, %p79
    %p82 = scmp.ne.s32.totalorder %s67, %s81
    %p83 = scmp.eq.s32.totalorder %s15, 0
    %p84 = por %p82, %p83
    %s85 = ssub.s32 %s9, %s16
    %p86 = scmp.eq.s32.totalorder %s85, 0
    %s88 = sadd.s32 %s87, 1
    %s89 = scalar_select %p86, %s87, %s88
    %p92 = pneg %p86
    %p93 = scmp.eq.s32.totalorder %s9, 1
    %p94 = por %p92, %p93
    %p95 = scmp.ne.s32.totalorder %s87, %s90
    %p96 = scmp.eq.s32.totalorder %s9, 0
    %p97 = por %p95, %p96
    %p98 = scmp.ne.s32.totalorder %s87, %s90
    %p99 = scmp.eq.s32.totalorder %s14, 1
    %p100 = por %p98, %p99
    %p101 = scmp.ne.s32.totalorder %s90, %s91
    %p102 = scmp.eq.s32.totalorder %s14, 0
    %p103 = por %p101, %p102
    %p104 = scmp.ne.s32.totalorder %s90, %s91
    %p105 = scmp.eq.s32.totalorder %s15, 1
    %p106 = por %p104, %p105
    %p108 = scmp.ne.s32.totalorder %s91, %s107
    %p109 = scmp.eq.s32.totalorder %s15, 0
    %p110 = por %p108, %p109
    %p111 = scmp.le.s32.totalorder 1, %s9
    %p112 = scmp.lt.s32.totalorder %s9, 3
    %p113 = pnand %p111, %p112
    %p114 = pneg %p113
    // Predicated region
    $region9: #{tpu_custom_call.1} parent=5 // pred_check
      _
    $region10: #{tpu_custom_call.1} parent=5 // pred_check_branch
      %116 = sbr.rel (%p113) target = $region12
    $region11: #{tpu_custom_call.1} parent=5 // pred_region
      %s117 = ssub.s32 %s9, 1
      // Predicated region
      $region13: #{tpu_custom_call.1} parent=11 // pred_check
        %p118 = pneg %p56
      $region14: #{tpu_custom_call.1} parent=11 // pred_check_branch
        %120 = sbr.rel (%p118) target = $region16
      $region15: #{tpu_custom_call.1} parent=11 // pred_region
        _
      $region16: #{tpu_custom_call.1} parent=11 // pred_fallthru
        _
      // Predicated region
      $region17: #{tpu_custom_call.1} parent=11 // pred_check
        %p121 = pneg %p77
      $region18: #{tpu_custom_call.1} parent=11 // pred_check_branch
        %123 = sbr.rel (%p121) target = $region20
      $region19: #{tpu_custom_call.1} parent=11 // pred_region
        _
      $region20: #{tpu_custom_call.1} parent=11 // pred_fallthru
        _
    $region12: #{tpu_custom_call.1} parent=5 // pred_fallthru
      _
    %p124 = scmp.lt.s32.totalorder %s9, 2
    // Predicated region
    $region21: #{tpu_custom_call.1} parent=5 // pred_check
      %p125 = pneg %p124
    $region22: #{tpu_custom_call.1} parent=5 // pred_check_branch
      %127 = sbr.rel (%p125) target = $region24
    $region23: #{tpu_custom_call.1} parent=5 // pred_region
      // Predicated region
      $region25: #{tpu_custom_call.1} parent=23 // pred_check
        %p128 = pneg %p29
      $region26: #{tpu_custom_call.1} parent=23 // pred_check_branch
        %130 = sbr.rel (%p128) target = $region28
      $region27: #{tpu_custom_call.1} parent=23 // pred_region
        %p131 = scmp.lt.s32.totalorder %s9, 1
        %s132 = scalar_select %p131, %s9, 1
        %s133 = scalar_lea.vmem %s0, %s132
      $region28: #{tpu_custom_call.1} parent=23 // pred_fallthru
        _
    $region24: #{tpu_custom_call.1} parent=5 // pred_fallthru
      _
    %p134 = scmp.le.s32.totalorder 1, %s9
    %p135 = scmp.lt.s32.totalorder %s9, 3
    %p136 = pnand %p134, %p135
    %p137 = pneg %p136
    // Predicated region
    $region29: #{tpu_custom_call.1} parent=5 // pred_check
      _
    $region30: #{tpu_custom_call.1} parent=5 // pred_check_branch
      %139 = sbr.rel (%p136) target = $region32
    $region31: #{tpu_custom_call.1} parent=5 // pred_region
      %s140 = ssub.s32 %s9, 1
      %p141 = scmp.lt.s32.totalorder %s14, 1
      %s142 = scalar_select %p141, %s14, 1
      %s143 = scalar_lea.vmem %s0, %s142
      %p144 = pneg %p35
      %p145 = pneg %p32
      %p146 = pneg %p56
      %p147 = pneg %p53
      %p148 = pneg %p77
      %p149 = pneg %p74
      %p150 = pneg %p103
      %p151 = pneg %p100
      %s152 = smul.u32 16, %s14
      %p153 = scmp.lt.s32.totalorder %s152, 31
      %s154 = scalar_select %p153, %s152, 31
      %s155 = smul.addr %s154, 8
      %s156 = scalar_lea.vmem %s3, %s155
      %p157 = scmp.lt.s32.totalorder %s14, 1
      %s158 = scalar_select %p157, %s14, 1
      %s159 = scalar_lea.vmem %s0, %s158
      %s160 = smul.u32 16, %s14
      %p161 = scmp.lt.s32.totalorder %s160, 31
      %s162 = scalar_select %p161, %s160, 31
      %s163 = smul.addr %s162, 8
      %s164 = scalar_lea.vmem %s3, %s163
      %s165 = smul.u32 16, %s14
      %v166 = vld [vmem:[%s159] sm:$0x1]
      %v167 = vld [vmem:[%s1] sm:$0xff]
      %v168 = vld [vmem:[%s1 + $0x8] sm:$0xff]
      %v169 = vld [vmem:[%s1 + $0x10] sm:$0xff]
      %v170 = vld [vmem:[%s1 + $0x18] sm:$0xff]
      %v171 = vand.u32 %v166, 1
      %v172 = vshra.s32 %v166, 1
      %v173 = vcvt.s32.f32 %v171
      %v174 = vadd.f32 %v173, 0.0
      %v175 = vand.u32 %v172, 1
      %v176 = vshra.s32 %v172, 1
      %v177 = vcvt.s32.f32 %v175
      %v178 = vadd.f32 %v174, %v177
      %v179 = vand.u32 %v176, 1
      %v180 = vshra.s32 %v176, 1
      %v181 = vcvt.s32.f32 %v179
      %v182 = vadd.f32 %v178, %v181
      %v183 = vand.u32 %v180, 1
      %v184 = vshra.s32 %v180, 1
      %v185 = vcvt.s32.f32 %v183
      %v186 = vadd.f32 %v182, %v185
      %v187 = vand.u32 %v184, 1
      %v188 = vshra.s32 %v184, 1
      %v189 = vcvt.s32.f32 %v187
      %v190 = vadd.f32 %v186, %v189
      %v191 = vand.u32 %v188, 1
      %v192 = vshra.s32 %v188, 1
      %v193 = vcvt.s32.f32 %v191
      %v194 = vadd.f32 %v190, %v193
      %v195 = vand.u32 %v192, 1
      %v196 = vshra.s32 %v192, 1
      %v197 = vcvt.s32.f32 %v195
      %v198 = vadd.f32 %v194, %v197
      %v199 = vand.u32 %v196, 1
      %v200 = vcvt.s32.f32 %v199
      %v201 = vadd.f32 %v198, %v200
      %v202 = vmul.f32 %v167, 8.0
      %v203 = vmul.f32 %v168, 8.0
      %v204 = vmul.f32 %v169, 8.0
      %v205 = vmul.f32 %v170, 8.0
      %207 = vset.pattern.permute.xlu0 0
      %208 = vperm.xlu0 %207, %v202
      %v209 = vpop.permute.xlu0 %208
      %212 = vset.pattern.permute.xlu0 0
      %213 = vperm.xlu0 %212, %v203
      %v214 = vpop.permute.xlu0 %213
      %217 = vset.pattern.permute.xlu0 0
      %218 = vperm.xlu0 %217, %v204
      %v219 = vpop.permute.xlu0 %218
      %222 = vset.pattern.permute.xlu0 0
      %223 = vperm.xlu0 %222, %v205
      %v224 = vpop.permute.xlu0 %223
      %230 = vrot.lane.b32.xlu0 %v167, 1
      %v231 = vpop.permute.xlu0 %230
      %232 = vrot.lane.b32.xlu0 %v168, 1
      %v233 = vpop.permute.xlu0 %232
      %234 = vrot.lane.b32.xlu0 %v169, 1
      %v235 = vpop.permute.xlu0 %234
      %236 = vrot.lane.b32.xlu0 %v170, 1
      %v237 = vpop.permute.xlu0 %236
      %v242 = vsub.f32 %v167, %v231
      %v243 = vsub.f32 %v168, %v233
      %v244 = vsub.f32 %v169, %v235
      %v245 = vsub.f32 %v170, %v237
      %247 = vset.pattern.permute.xlu0 1
      %248 = vperm.xlu0 %247, %v242
      %v249 = vpop.permute.xlu0 %248
      %252 = vset.pattern.permute.xlu0 1
      %253 = vperm.xlu0 %252, %v243
      %v254 = vpop.permute.xlu0 %253
      %257 = vset.pattern.permute.xlu0 1
      %258 = vperm.xlu0 %257, %v244
      %v259 = vpop.permute.xlu0 %258
      %262 = vset.pattern.permute.xlu0 1
      %263 = vperm.xlu0 %262, %v245
      %v264 = vpop.permute.xlu0 %263
      %v267 = vlaneseq
      %v268 = vshrl.u32 %v267, 7
      %v269 = vsub.s32 0, %v268
      %v270 = vrot.slane %v201, %v269
      %v272 = vmul.f32 %v249, %v270
      %v273 = vmul.f32 %v254, %v270
      %v274 = vmul.f32 %v259, %v270
      %v275 = vmul.f32 %v264, %v270
      %v276 = vadd.f32 %v209, %v272
      %v277 = vadd.f32 %v214, %v273
      %v278 = vadd.f32 %v219, %v274
      %v279 = vadd.f32 %v224, %v275
      %280 = vxpose.xlu0.b32.start [1/16] %v276, 128
      %281 = vxpose.xlu0.b32.cont [2/16] %v277, 128
      %282 = vxpose.xlu0.b32.cont [3/16] %v278, 128
      %283 = vxpose.xlu0.b32.cont [4/16] %v279, 128
      %284 = vxpose.xlu0.b32.cont [5/16] 0.0, 128
      %285 = vxpose.xlu0.b32.cont [6/16] 0.0, 128
      %286 = vxpose.xlu0.b32.cont [7/16] 0.0, 128
      %287 = vxpose.xlu0.b32.cont [8/16] 0.0, 128
      %288 = vxpose.xlu0.b32.cont [9/16] 0.0, 128
      %289 = vxpose.xlu0.b32.cont [10/16] 0.0, 128
      %290 = vxpose.xlu0.b32.cont [11/16] 0.0, 128
      %291 = vxpose.xlu0.b32.cont [12/16] 0.0, 128
      %292 = vxpose.xlu0.b32.cont [13/16] 0.0, 128
      %293 = vxpose.xlu0.b32.cont [14/16] 0.0, 128
      %294 = vxpose.xlu0.b32.cont [15/16] 0.0, 128
      %295 = vxpose.xlu0.b32.end [16/16] 0.0, 128
      %v296 = vpop.trf.xlu0
      %v297 = vpop.trf.xlu0
      %v298 = vpop.trf.xlu0
      %v299 = vpop.trf.xlu0
      %v300 = vpop.trf.xlu0
      %v301 = vpop.trf.xlu0
      %v302 = vpop.trf.xlu0
      %v303 = vpop.trf.xlu0
      %v304 = vpop.trf.xlu0
      %v305 = vpop.trf.xlu0
      %v306 = vpop.trf.xlu0
      %v307 = vpop.trf.xlu0
      %v308 = vpop.trf.xlu0
      %v309 = vpop.trf.xlu0
      %v310 = vpop.trf.xlu0
      %v311 = vpop.trf.xlu0
      %vm312 = vcmask 261120
      %313 = vst.msk [vmem:[%s164] sm:$0xff] %vm312, %v296
      %314 = vst.msk [vmem:[%s164 + $0x8] sm:$0xff] %vm312, %v297
      %315 = vst.msk [vmem:[%s164 + $0x10] sm:$0xff] %vm312, %v298
      %316 = vst.msk [vmem:[%s164 + $0x18] sm:$0xff] %vm312, %v299
      %317 = vst.msk [vmem:[%s164 + $0x20] sm:$0xff] %vm312, %v300
      %318 = vst.msk [vmem:[%s164 + $0x28] sm:$0xff] %vm312, %v301
      %319 = vst.msk [vmem:[%s164 + $0x30] sm:$0xff] %vm312, %v302
      %320 = vst.msk [vmem:[%s164 + $0x38] sm:$0xff] %vm312, %v303
      %321 = vst.msk [vmem:[%s164 + $0x40] sm:$0xff] %vm312, %v304
      %322 = vst.msk [vmem:[%s164 + $0x48] sm:$0xff] %vm312, %v305
      %323 = vst.msk [vmem:[%s164 + $0x50] sm:$0xff] %vm312, %v306
      %324 = vst.msk [vmem:[%s164 + $0x58] sm:$0xff] %vm312, %v307
      %325 = vst.msk [vmem:[%s164 + $0x60] sm:$0xff] %vm312, %v308
      %326 = vst.msk [vmem:[%s164 + $0x68] sm:$0xff] %vm312, %v309
      %327 = vst.msk [vmem:[%s164 + $0x70] sm:$0xff] %vm312, %v310
      %328 = vst.msk [vmem:[%s164 + $0x78] sm:$0xff] %vm312, %v311
      %v329 = vld [vmem:[%s2] sm:$0xff]
      %v330 = vld [vmem:[%s2 + $0x8] sm:$0xff]
      %v331 = vld [vmem:[%s2 + $0x10] sm:$0xff]
      %v332 = vld [vmem:[%s2 + $0x18] sm:$0xff]
      %vm333 = vcmp.lt.s32.totalorder %v166, 0
      %v334 = vsub.s32 0, %v166
      %v335 = vsel %vm333, %v334, %v166
      %v336 = vmul.u32.u64.compose %v335, 2863311531
      %v337 = vextract.low.u32 %v336
      %v338 = vextract.high.u32 %v336
      %v339 = vshrl.u32 %v338, 1
      %v340 = vmul.u32 %v339, 3
      %v341 = vsub.s32 %v335, %v340
      %v342 = vsub.s32 0, %v339
      %v343 = vsel %vm333, %v342, %v339
      %v344 = vmul.u32 %v343, 3
      %v345 = vsub.s32 %v166, %v344
      %vm346 = vcmp.eq.s32.totalorder %v345, 1
      %v347 = vsel %vm346, 1, 0
      %v348 = vcvt.s32.f32 %v347
      %v349 = vadd.f32 %v348, 0.0
      %vm350 = vcmp.eq.s32.totalorder %v345, 2
      %v351 = vsel %vm350, 1, 0
      %v352 = vcvt.s32.f32 %v351
      %v353 = vadd.f32 %v352, 0.0
      %vm354 = vcmp.lt.s32.totalorder %v343, 0
      %v355 = vsub.s32 0, %v343
      %v356 = vsel %vm354, %v355, %v343
      %v357 = vmul.u32.u64.compose %v356, 2863311531
      %v358 = vextract.low.u32 %v357
      %v359 = vextract.high.u32 %v357
      %v360 = vshrl.u32 %v359, 1
      %v361 = vmul.u32 %v360, 3
      %v362 = vsub.s32 %v356, %v361
      %v363 = vsub.s32 0, %v360
      %v364 = vsel %vm354, %v363, %v360
      %v365 = vmul.u32 %v364, 3
      %v366 = vsub.s32 %v343, %v365
      %vm367 = vcmp.eq.s32.totalorder %v366, 1
      %v368 = vsel %vm367, 1, 0
      %v369 = vcvt.s32.f32 %v368
      %v370 = vadd.f32 %v349, %v369
      %vm371 = vcmp.eq.s32.totalorder %v366, 2
      %v372 = vsel %vm371, 1, 0
      %v373 = vcvt.s32.f32 %v372
      %v374 = vadd.f32 %v353, %v373
      %vm375 = vcmp.lt.s32.totalorder %v364, 0
      %v376 = vsub.s32 0, %v364
      %v377 = vsel %vm375, %v376, %v364
      %v378 = vmul.u32.u64.compose %v377, 2863311531
      %v379 = vextract.low.u32 %v378
      %v380 = vextract.high.u32 %v378
      %v381 = vshrl.u32 %v380, 1
      %v382 = vmul.u32 %v381, 3
      %v383 = vsub.s32 %v377, %v382
      %v384 = vsub.s32 0, %v381
      %v385 = vsel %vm375, %v384, %v381
      %v386 = vmul.u32 %v385, 3
      %v387 = vsub.s32 %v364, %v386
      %vm388 = vcmp.eq.s32.totalorder %v387, 1
      %v389 = vsel %vm388, 1, 0
      %v390 = vcvt.s32.f32 %v389
      %v391 = vadd.f32 %v370, %v390
      %vm392 = vcmp.eq.s32.totalorder %v387, 2
      %v393 = vsel %vm392, 1, 0
      %v394 = vcvt.s32.f32 %v393
      %v395 = vadd.f32 %v374, %v394
      %vm396 = vcmp.lt.s32.totalorder %v385, 0
      %v397 = vsub.s32 0, %v385
      %v398 = vsel %vm396, %v397, %v385
      %v399 = vmul.u32.u64.compose %v398, 2863311531
      %v400 = vextract.low.u32 %v399
      %v401 = vextract.high.u32 %v399
      %v402 = vshrl.u32 %v401, 1
      %v403 = vmul.u32 %v402, 3
      %v404 = vsub.s32 %v398, %v403
      %v405 = vsub.s32 0, %v402
      %v406 = vsel %vm396, %v405, %v402
      %v407 = vmul.u32 %v406, 3
      %v408 = vsub.s32 %v385, %v407
      %vm409 = vcmp.eq.s32.totalorder %v408, 1
      %v410 = vsel %vm409, 1, 0
      %v411 = vcvt.s32.f32 %v410
      %v412 = vadd.f32 %v391, %v411
      %vm413 = vcmp.eq.s32.totalorder %v408, 2
      %v414 = vsel %vm413, 1, 0
      %v415 = vcvt.s32.f32 %v414
      %v416 = vadd.f32 %v395, %v415
      %vm417 = vcmp.lt.s32.totalorder %v406, 0
      %v418 = vsub.s32 0, %v406
      %v419 = vsel %vm417, %v418, %v406
      %v420 = vmul.u32.u64.compose %v419, 2863311531
      %v421 = vextract.low.u32 %v420
      %v422 = vextract.high.u32 %v420
      %v423 = vshrl.u32 %v422, 1
      %v424 = vmul.u32 %v423, 3
      %v425 = vsub.s32 %v419, %v424
      %v426 = vsub.s32 0, %v423
      %v427 = vsel %vm417, %v426, %v423
      %v428 = vmul.u32 %v427, 3
      %v429 = vsub.s32 %v406, %v428
      %vm430 = vcmp.eq.s32.totalorder %v429, 1
      %v431 = vsel %vm430, 1, 0
      %v432 = vcvt.s32.f32 %v431
      %v433 = vadd.f32 %v412, %v432
      %vm434 = vcmp.eq.s32.totalorder %v429, 2
      %v435 = vsel %vm434, 1, 0
      %v436 = vcvt.s32.f32 %v435
      %v437 = vadd.f32 %v416, %v436
      %vm438 = vcmp.lt.s32.totalorder %v427, 0
      %v439 = vsub.s32 0, %v427
      %v440 = vsel %vm438, %v439, %v427
      %v441 = vmul.u32.u64.compose %v440, 2863311531
      %v442 = vextract.low.u32 %v441
      %v443 = vextract.high.u32 %v441
      %v444 = vshrl.u32 %v443, 1
      %v445 = vmul.u32 %v444, 3
      %v446 = vsub.s32 %v440, %v445
      %v447 = vsub.s32 0, %v444
      %v448 = vsel %vm438, %v447, %v444
      %v449 = vmul.u32 %v448, 3
      %v450 = vsub.s32 %v427, %v449
      %vm451 = vcmp.eq.s32.totalorder %v450, 1
      %v452 = vsel %vm451, 1, 0
      %v453 = vcvt.s32.f32 %v452
      %v454 = vadd.f32 %v433, %v453
      %vm455 = vcmp.eq.s32.totalorder %v450, 2
      %v456 = vsel %vm455, 1, 0
      %v457 = vcvt.s32.f32 %v456
      %v458 = vadd.f32 %v437, %v457
      %vm459 = vcmp.lt.s32.totalorder %v448, 0
      %v460 = vsub.s32 0, %v448
      %v461 = vsel %vm459, %v460, %v448
      %v462 = vmul.u32.u64.compose %v461, 2863311531
      %v463 = vextract.low.u32 %v462
      %v464 = vextract.high.u32 %v462
      %v465 = vshrl.u32 %v464, 1
      %v466 = vmul.u32 %v465, 3
      %v467 = vsub.s32 %v461, %v466
      %v468 = vsub.s32 0, %v465
      %v469 = vsel %vm459, %v468, %v465
      %v470 = vmul.u32 %v469, 3
      %v471 = vsub.s32 %v448, %v470
      %vm472 = vcmp.eq.s32.totalorder %v471, 1
      %v473 = vsel %vm472, 1, 0
      %v474 = vcvt.s32.f32 %v473
      %v475 = vadd.f32 %v454, %v474
      %vm476 = vcmp.eq.s32.totalorder %v471, 2
      %v477 = vsel %vm476, 1, 0
      %v478 = vcvt.s32.f32 %v477
      %v479 = vadd.f32 %v458, %v478
      %vm480 = vcmp.lt.s32.totalorder %v469, 0
      %v481 = vsub.s32 0, %v469
      %v482 = vsel %vm480, %v481, %v469
      %v483 = vmul.u32.u64.compose %v482, 2863311531
      %v484 = vextract.low.u32 %v483
      %v485 = vextract.high.u32 %v483
      %v486 = vshrl.u32 %v485, 1
      %v487 = vmul.u32 %v486, 3
      %v488 = vsub.s32 %v482, %v487
      %v489 = vsub.s32 0, %v486
      %v490 = vsel %vm480, %v489, %v486
      %v491 = vmul.u32 %v490, 3
      %v492 = vsub.s32 %v469, %v491
      %vm493 = vcmp.eq.s32.totalorder %v492, 1
      %v494 = vsel %vm493, 1, 0
      %v495 = vcvt.s32.f32 %v494
      %v496 = vadd.f32 %v475, %v495
      %vm497 = vcmp.eq.s32.totalorder %v492, 2
      %v498 = vsel %vm497, 1, 0
      %v499 = vcvt.s32.f32 %v498
      %v500 = vadd.f32 %v479, %v499
      %v501 = vmul.f32 %v329, 8.0
      %v502 = vmul.f32 %v330, 8.0
      %v503 = vmul.f32 %v331, 8.0
      %v504 = vmul.f32 %v332, 8.0
      %506 = vset.pattern.permute.xlu0 0
      %507 = vperm.xlu0 %506, %v501
      %v508 = vpop.permute.xlu0 %507
      %511 = vset.pattern.permute.xlu0 0
      %512 = vperm.xlu0 %511, %v502
      %v513 = vpop.permute.xlu0 %512
      %516 = vset.pattern.permute.xlu0 0
      %517 = vperm.xlu0 %516, %v503
      %v518 = vpop.permute.xlu0 %517
      %521 = vset.pattern.permute.xlu0 0
      %522 = vperm.xlu0 %521, %v504
      %v523 = vpop.permute.xlu0 %522
      %529 = vrot.lane.b32.xlu0 %v329, 1
      %v530 = vpop.permute.xlu0 %529
      %531 = vrot.lane.b32.xlu0 %v330, 1
      %v532 = vpop.permute.xlu0 %531
      %533 = vrot.lane.b32.xlu0 %v331, 1
      %v534 = vpop.permute.xlu0 %533
      %535 = vrot.lane.b32.xlu0 %v332, 1
      %v536 = vpop.permute.xlu0 %535
      %v541 = vsub.f32 %v329, %v530
      %v542 = vsub.f32 %v330, %v532
      %v543 = vsub.f32 %v331, %v534
      %v544 = vsub.f32 %v332, %v536
      %546 = vset.pattern.permute.xlu0 1
      %547 = vperm.xlu0 %546, %v541
      %v548 = vpop.permute.xlu0 %547
      %551 = vset.pattern.permute.xlu0 1
      %552 = vperm.xlu0 %551, %v542
      %v553 = vpop.permute.xlu0 %552
      %556 = vset.pattern.permute.xlu0 1
      %557 = vperm.xlu0 %556, %v543
      %v558 = vpop.permute.xlu0 %557
      %561 = vset.pattern.permute.xlu0 1
      %562 = vperm.xlu0 %561, %v544
      %v563 = vpop.permute.xlu0 %562
      %v566 = vlaneseq
      %v567 = vshrl.u32 %v566, 7
      %v568 = vsub.s32 0, %v567
      %v569 = vrot.slane %v496, %v568
      %v571 = vmul.f32 %v548, %v569
      %v572 = vmul.f32 %v553, %v569
      %v573 = vmul.f32 %v558, %v569
      %v574 = vmul.f32 %v563, %v569
      %v575 = vadd.f32 %v508, %v571
      %v576 = vadd.f32 %v513, %v572
      %v577 = vadd.f32 %v518, %v573
      %v578 = vadd.f32 %v523, %v574
      %579 = vrot.lane.b32.xlu0 %v329, 2
      %v580 = vpop.permute.xlu0 %579
      %581 = vrot.lane.b32.xlu0 %v330, 2
      %v582 = vpop.permute.xlu0 %581
      %583 = vrot.lane.b32.xlu0 %v331, 2
      %v584 = vpop.permute.xlu0 %583
      %585 = vrot.lane.b32.xlu0 %v332, 2
      %v586 = vpop.permute.xlu0 %585
      %v591 = vsub.f32 %v329, %v580
      %v592 = vsub.f32 %v330, %v582
      %v593 = vsub.f32 %v331, %v584
      %v594 = vsub.f32 %v332, %v586
      %596 = vset.pattern.permute.xlu0 2
      %597 = vperm.xlu0 %596, %v591
      %v598 = vpop.permute.xlu0 %597
      %601 = vset.pattern.permute.xlu0 2
      %602 = vperm.xlu0 %601, %v592
      %v603 = vpop.permute.xlu0 %602
      %606 = vset.pattern.permute.xlu0 2
      %607 = vperm.xlu0 %606, %v593
      %v608 = vpop.permute.xlu0 %607
      %611 = vset.pattern.permute.xlu0 2
      %612 = vperm.xlu0 %611, %v594
      %v613 = vpop.permute.xlu0 %612
      %v616 = vlaneseq
      %v617 = vshrl.u32 %v616, 7
      %v618 = vsub.s32 0, %v617
      %v619 = vrot.slane %v500, %v618
      %v621 = vmul.f32 %v598, %v619
      %v622 = vmul.f32 %v603, %v619
      %v623 = vmul.f32 %v608, %v619
      %v624 = vmul.f32 %v613, %v619
      %v625 = vadd.f32 %v575, %v621
      %v626 = vadd.f32 %v576, %v622
      %v627 = vadd.f32 %v577, %v623
      %v628 = vadd.f32 %v578, %v624
      %629 = vxpose.xlu0.b32.start [1/16] %v625, 128
      %630 = vxpose.xlu0.b32.cont [2/16] %v626, 128
      %631 = vxpose.xlu0.b32.cont [3/16] %v627, 128
      %632 = vxpose.xlu0.b32.cont [4/16] %v628, 128
      %633 = vxpose.xlu0.b32.cont [5/16] 0.0, 128
      %634 = vxpose.xlu0.b32.cont [6/16] 0.0, 128
      %635 = vxpose.xlu0.b32.cont [7/16] 0.0, 128
      %636 = vxpose.xlu0.b32.cont [8/16] 0.0, 128
      %637 = vxpose.xlu0.b32.cont [9/16] 0.0, 128
      %638 = vxpose.xlu0.b32.cont [10/16] 0.0, 128
      %639 = vxpose.xlu0.b32.cont [11/16] 0.0, 128
      %640 = vxpose.xlu0.b32.cont [12/16] 0.0, 128
      %641 = vxpose.xlu0.b32.cont [13/16] 0.0, 128
      %642 = vxpose.xlu0.b32.cont [14/16] 0.0, 128
      %643 = vxpose.xlu0.b32.cont [15/16] 0.0, 128
      %644 = vxpose.xlu0.b32.end [16/16] 0.0, 128
      %v645 = vpop.trf.xlu0
      %v646 = vpop.trf.xlu0
      %v647 = vpop.trf.xlu0
      %v648 = vpop.trf.xlu0
      %v649 = vpop.trf.xlu0
      %v650 = vpop.trf.xlu0
      %v651 = vpop.trf.xlu0
      %v652 = vpop.trf.xlu0
      %v653 = vpop.trf.xlu0
      %v654 = vpop.trf.xlu0
      %v655 = vpop.trf.xlu0
      %v656 = vpop.trf.xlu0
      %v657 = vpop.trf.xlu0
      %v658 = vpop.trf.xlu0
      %v659 = vpop.trf.xlu0
      %v660 = vpop.trf.xlu0
      %677 = vrot.lane.b32.xlu0 %v645, 32
      %v678 = vpop.permute.xlu0 %677
      %679 = vrot.lane.b32.xlu0 %v646, 32
      %v680 = vpop.permute.xlu0 %679
      %681 = vrot.lane.b32.xlu0 %v647, 32
      %v682 = vpop.permute.xlu0 %681
      %683 = vrot.lane.b32.xlu0 %v648, 32
      %v684 = vpop.permute.xlu0 %683
      %685 = vrot.lane.b32.xlu0 %v649, 32
      %v686 = vpop.permute.xlu0 %685
      %687 = vrot.lane.b32.xlu0 %v650, 32
      %v688 = vpop.permute.xlu0 %687
      %689 = vrot.lane.b32.xlu0 %v651, 32
      %v690 = vpop.permute.xlu0 %689
      %691 = vrot.lane.b32.xlu0 %v652, 32
      %v692 = vpop.permute.xlu0 %691
      %693 = vrot.lane.b32.xlu0 %v653, 32
      %v694 = vpop.permute.xlu0 %693
      %695 = vrot.lane.b32.xlu0 %v654, 32
      %v696 = vpop.permute.xlu0 %695
      %697 = vrot.lane.b32.xlu0 %v655, 32
      %v698 = vpop.permute.xlu0 %697
      %699 = vrot.lane.b32.xlu0 %v656, 32
      %v700 = vpop.permute.xlu0 %699
      %701 = vrot.lane.b32.xlu0 %v657, 32
      %v702 = vpop.permute.xlu0 %701
      %703 = vrot.lane.b32.xlu0 %v658, 32
      %v704 = vpop.permute.xlu0 %703
      %705 = vrot.lane.b32.xlu0 %v659, 32
      %v706 = vpop.permute.xlu0 %705
      %707 = vrot.lane.b32.xlu0 %v660, 32
      %v708 = vpop.permute.xlu0 %707
      %vm725 = vcmask 523520
      %726 = vst.msk [vmem:[%s164] sm:$0xff] %vm725, %v678
      %727 = vst.msk [vmem:[%s164 + $0x8] sm:$0xff] %vm725, %v680
      %728 = vst.msk [vmem:[%s164 + $0x10] sm:$0xff] %vm725, %v682
      %729 = vst.msk [vmem:[%s164 + $0x18] sm:$0xff] %vm725, %v684
      %730 = vst.msk [vmem:[%s164 + $0x20] sm:$0xff] %vm725, %v686
      %731 = vst.msk [vmem:[%s164 + $0x28] sm:$0xff] %vm725, %v688
      %732 = vst.msk [vmem:[%s164 + $0x30] sm:$0xff] %vm725, %v690
      %733 = vst.msk [vmem:[%s164 + $0x38] sm:$0xff] %vm725, %v692
      %734 = vst.msk [vmem:[%s164 + $0x40] sm:$0xff] %vm725, %v694
      %735 = vst.msk [vmem:[%s164 + $0x48] sm:$0xff] %vm725, %v696
      %736 = vst.msk [vmem:[%s164 + $0x50] sm:$0xff] %vm725, %v698
      %737 = vst.msk [vmem:[%s164 + $0x58] sm:$0xff] %vm725, %v700
      %738 = vst.msk [vmem:[%s164 + $0x60] sm:$0xff] %vm725, %v702
      %739 = vst.msk [vmem:[%s164 + $0x68] sm:$0xff] %vm725, %v704
      %740 = vst.msk [vmem:[%s164 + $0x70] sm:$0xff] %vm725, %v706
      %741 = vst.msk [vmem:[%s164 + $0x78] sm:$0xff] %vm725, %v708
      %s742 = smul.u32 16, %s14
      %p743 = scmp.lt.s32.totalorder %s742, 31
      %s744 = scalar_select %p743, %s742, 31
      %s745 = smul.addr %s744, 8
      %s746 = scalar_lea.vmem %s3, %s745
      // Predicated region
      $region33: #{tpu_custom_call.1} parent=31 // pred_check
        %p747 = pneg %p100
      $region34: #{tpu_custom_call.1} parent=31 // pred_check_branch
        %749 = sbr.rel (%p747) target = $region36
      $region35: #{tpu_custom_call.1} parent=31 // pred_region
        %s750 = smul.u32 16, %s14
      $region36: #{tpu_custom_call.1} parent=31 // pred_fallthru
        _
    $region32: #{tpu_custom_call.1} parent=5 // pred_fallthru
      _
    %p751 = scmp.le.s32.totalorder 2, %s9
    // Predicated region
    $region37: #{tpu_custom_call.1} parent=5 // pred_check
      %p752 = pneg %p751
    $region38: #{tpu_custom_call.1} parent=5 // pred_check_branch
      %754 = sbr.rel (%p752) target = $region40
    $region39: #{tpu_custom_call.1} parent=5 // pred_region
      %s755 = ssub.s32 %s9, 2
      // Predicated region
      $region41: #{tpu_custom_call.1} parent=39 // pred_check
        %p756 = pneg %p106
      $region42: #{tpu_custom_call.1} parent=39 // pred_check_branch
        %758 = sbr.rel (%p756) target = $region44
      $region43: #{tpu_custom_call.1} parent=39 // pred_region
        %s759 = smul.u32 16, %s15
        %p760 = scmp.lt.s32.totalorder %s759, 31
        %s761 = scalar_select %p760, %s759, 31
        %s762 = smul.addr %s761, 8
        %s763 = scalar_lea.vmem %s3, %s762
      $region44: #{tpu_custom_call.1} parent=39 // pred_fallthru
        _
    $region40: #{tpu_custom_call.1} parent=5 // pred_fallthru
      _
  $region6: #{tpu_custom_call.1} parent=0 // loop_footer
    %s13 = sadd.s32 1, %s9
  $region7: #{tpu_custom_call.1} parent=0 // loop_footer_branch
    %8 = sbr.rel target = $region3
  $region8: #{tpu_custom_call.1} parent=0 // loop_exit
    _

// kernel: tpu_custom_call.1
$region0: #{tpu_custom_call.1}
  #allocation0 [shape = 'u32[]', space=smem, size = 0x4, offset = 0x4, fixed_abs, tag = 'smem constant byte address 0x4 - core index']
  #allocation1 [shape = 'u32[144,128]{1,0:T(1,128)}', space=vmem, size = 0x12000, scoped, tag = 'internal scratch']
  %s0 = inlined_call_operand.vmem [shape: s32[1,256], index: 0, kind: input, shape index: {}]
  %s1 = inlined_call_operand.vmem [shape: f32[32,2], index: 1, kind: input, shape index: {}]
  %s2 = inlined_call_operand.vmem [shape: f32[32,3], index: 2, kind: input, shape index: {}]
  %s3 = inlined_call_operand.hbm [shape: f32[64,256], index: 3, kind: output, shape index: {}]
  %s4 = sld [smem:[#allocation0]]
  $region45: #{tpu_custom_call.1} parent=0
    _
  %s6 = ssub.s32 1, %s4
  %s7 = scalar_select 0, %s6, %s4
  $region1: #{tpu_custom_call.1} parent=0
    #allocation2 [shape = 'u8[65536]{0}', space=vmem, size = 0x10000, scoped, tag = 'output window, operand 0']
    #allocation3 [shape = 's32[2]{0}', space=sflag, size = 0x8, scoped, tag = 'scoped memory for tpu_custom_call.1']
    %8 = vsyncpa [#allocation3], 0
    %s9 = scalar_lea.sflag [#allocation3], 1
    %10 = vsyncpa %s9, 0
    loop: start=0, step=1, limit=4
    $region2: #{tpu_custom_call.1} parent=1 // loop_pre_header
      _
    $region3: #{tpu_custom_call.1} parent=1 // loop_header
      %s12 = sphi 0, %s16
      %p13 = scmp.ge.s32.totalorder %s12, 4
      %s22 = sphi 0, %s24
      %s25 = sphi 0, %s22
      %s26 = sphi 0, %s25
      %s42 = sphi 0, %s26
      %s46 = sphi 0, %s46
      %s48 = sphi 0, %s46
      %s49 = sphi 0, %s48
      %s63 = sphi 0, %s49
      %s67 = sphi 0, %s67
      %s69 = sphi 0, %s67
      %s70 = sphi 0, %s69
      %s84 = sphi 0, %s70
      %s90 = sphi 0, %s92
      %s93 = sphi 0, %s90
      %s94 = sphi 0, %s93
      %s110 = sphi 0, %s94
    $region4: #{tpu_custom_call.1} parent=1 // loop_header_branch
      %15 = sbr.rel (%p13) target = $region8
    $region5: #{tpu_custom_call.1} parent=1 // loop_body
      %s17 = ssub.s32 %s12, 1
      %s18 = ssub.s32 %s12, 2
      %s19 = sadd.s32 %s12, 1
      %s20 = ssub.s32 %s12, %s19
      %p21 = scmp.eq.s32.totalorder %s20, 0
      %s23 = sadd.s32 %s22, 1
      %s24 = scalar_select %p21, %s22, %s23
      %p27 = pneg %p21
      %p28 = scmp.eq.s32.totalorder %s12, 1
      %p29 = por %p27, %p28
      %p30 = scmp.ne.s32.totalorder %s22, %s25
      %p31 = scmp.eq.s32.totalorder %s12, 0
      %p32 = por %p30, %p31
      %p33 = scmp.ne.s32.totalorder %s22, %s25
      %p34 = scmp.eq.s32.totalorder %s17, 1
      %p35 = por %p33, %p34
      %p36 = scmp.ne.s32.totalorder %s25, %s26
      %p37 = scmp.eq.s32.totalorder %s17, 0
      %p38 = por %p36, %p37
      %p39 = scmp.ne.s32.totalorder %s25, %s26
      %p40 = scmp.eq.s32.totalorder %s18, 1
      %p41 = por %p39, %p40
      %p43 = scmp.ne.s32.totalorder %s26, %s42
      %p44 = scmp.eq.s32.totalorder %s18, 0
      %p45 = por %p43, %p44
      %s47 = sadd.s32 %s46, 1
      %p50 = scmp.eq.s32.totalorder %s12, 1
      %p51 = scmp.ne.s32.totalorder %s46, %s48
      %p52 = scmp.eq.s32.totalorder %s12, 0
      %p53 = por %p51, %p52
      %p54 = scmp.ne.s32.totalorder %s46, %s48
      %p55 = scmp.eq.s32.totalorder %s17, 1
      %p56 = por %p54, %p55
      %p57 = scmp.ne.s32.totalorder %s48, %s49
      %p58 = scmp.eq.s32.totalorder %s17, 0
      %p59 = por %p57, %p58
      %p60 = scmp.ne.s32.totalorder %s48, %s49
      %p61 = scmp.eq.s32.totalorder %s18, 1
      %p62 = por %p60, %p61
      %p64 = scmp.ne.s32.totalorder %s49, %s63
      %p65 = scmp.eq.s32.totalorder %s18, 0
      %p66 = por %p64, %p65
      %s68 = sadd.s32 %s67, 1
      %p71 = scmp.eq.s32.totalorder %s12, 1
      %p72 = scmp.ne.s32.totalorder %s67, %s69
      %p73 = scmp.eq.s32.totalorder %s12, 0
      %p74 = por %p72, %p73
      %p75 = scmp.ne.s32.totalorder %s67, %s69
      %p76 = scmp.eq.s32.totalorder %s17, 1
      %p77 = por %p75, %p76
      %p78 = scmp.ne.s32.totalorder %s69, %s70
      %p79 = scmp.eq.s32.totalorder %s17, 0
      %p80 = por %p78, %p79
      %p81 = scmp.ne.s32.totalorder %s69, %s70
      %p82 = scmp.eq.s32.totalorder %s18, 1
      %p83 = por %p81, %p82
      %p85 = scmp.ne.s32.totalorder %s70, %s84
      %p86 = scmp.eq.s32.totalorder %s18, 0
      %p87 = por %p85, %p86
      %s88 = ssub.s32 %s12, %s19
      %p89 = scmp.eq.s32.totalorder %s88, 0
      %s91 = sadd.s32 %s90, 1
      %s92 = scalar_select %p89, %s90, %s91
      %p95 = pneg %p89
      %p96 = scmp.eq.s32.totalorder %s12, 1
      %p97 = por %p95, %p96
      %p98 = scmp.ne.s32.totalorder %s90, %s93
      %p99 = scmp.eq.s32.totalorder %s12, 0
      %p100 = por %p98, %p99
      %p101 = scmp.ne.s32.totalorder %s90, %s93
      %p102 = scmp.eq.s32.totalorder %s17, 1
      %p103 = por %p101, %p102
      %p104 = scmp.ne.s32.totalorder %s93, %s94
      %p105 = scmp.eq.s32.totalorder %s17, 0
      %p106 = por %p104, %p105
      %p107 = scmp.ne.s32.totalorder %s93, %s94
      %p108 = scmp.eq.s32.totalorder %s18, 1
      %p109 = por %p107, %p108
      %p111 = scmp.ne.s32.totalorder %s94, %s110
      %p112 = scmp.eq.s32.totalorder %s18, 0
      %p113 = por %p111, %p112
      %p114 = scmp.le.s32.totalorder 1, %s12
      %p115 = scmp.lt.s32.totalorder %s12, 3
      %p116 = pnand %p114, %p115
      %p117 = pneg %p116
      // Predicated region
      $region9: #{tpu_custom_call.1} parent=5 // pred_check
        _
      $region10: #{tpu_custom_call.1} parent=5 // pred_check_branch
        %119 = sbr.rel (%p116) target = $region12
      $region11: #{tpu_custom_call.1} parent=5 // pred_region
        %s120 = ssub.s32 %s12, 1
        // Predicated region
        $region13: #{tpu_custom_call.1} parent=11 // pred_check
          %p121 = pneg %p59
        $region14: #{tpu_custom_call.1} parent=11 // pred_check_branch
          %123 = sbr.rel (%p121) target = $region16
        $region15: #{tpu_custom_call.1} parent=11 // pred_region
          _
        $region16: #{tpu_custom_call.1} parent=11 // pred_fallthru
          _
        // Predicated region
        $region17: #{tpu_custom_call.1} parent=11 // pred_check
          %p124 = pneg %p80
        $region18: #{tpu_custom_call.1} parent=11 // pred_check_branch
          %126 = sbr.rel (%p124) target = $region20
        $region19: #{tpu_custom_call.1} parent=11 // pred_region
          _
        $region20: #{tpu_custom_call.1} parent=11 // pred_fallthru
          _
      $region12: #{tpu_custom_call.1} parent=5 // pred_fallthru
        _
      %p127 = scmp.lt.s32.totalorder %s12, 2
      // Predicated region
      $region21: #{tpu_custom_call.1} parent=5 // pred_check
        %p128 = pneg %p127
      $region22: #{tpu_custom_call.1} parent=5 // pred_check_branch
        %130 = sbr.rel (%p128) target = $region24
      $region23: #{tpu_custom_call.1} parent=5 // pred_region
        // Predicated region
        $region25: #{tpu_custom_call.1} parent=23 // pred_check
          %p131 = pneg %p32
        $region26: #{tpu_custom_call.1} parent=23 // pred_check_branch
          %133 = sbr.rel (%p131) target = $region28
        $region27: #{tpu_custom_call.1} parent=23 // pred_region
          %p134 = scmp.lt.s32.totalorder %s12, 1
          %s135 = scalar_select %p134, %s12, 1
          %s136 = scalar_lea.vmem %s0, %s135
        $region28: #{tpu_custom_call.1} parent=23 // pred_fallthru
          _
      $region24: #{tpu_custom_call.1} parent=5 // pred_fallthru
        _
      %p137 = scmp.le.s32.totalorder 1, %s12
      %p138 = scmp.lt.s32.totalorder %s12, 3
      %p139 = pnand %p137, %p138
      %p140 = pneg %p139
      // Predicated region
      $region29: #{tpu_custom_call.1} parent=5 // pred_check
        _
      $region30: #{tpu_custom_call.1} parent=5 // pred_check_branch
        %142 = sbr.rel (%p139) target = $region32
      $region31: #{tpu_custom_call.1} parent=5 // pred_region
        %s143 = ssub.s32 %s12, 1
        %p144 = scmp.lt.s32.totalorder %s17, 1
        %s145 = scalar_select %p144, %s17, 1
        %s146 = scalar_lea.vmem %s0, %s145
        %p147 = pneg %p38
        %p148 = pneg %p35
        %p149 = pneg %p59
        %p150 = pneg %p56
        %p151 = pneg %p80
        %p152 = pneg %p77
        %p153 = pneg %p106
        %p154 = pneg %p103
        %s155 = sand.u32 %s93, 1
        %s156 = scalar_lea.sflag [#allocation3], %s155
        %s157 = sand.u32 %s93, 1
        %s158 = smul.addr %s157, 64
        %s159 = scalar_lea.vmem [#allocation2], %s158
        %p160 = scmp.lt.s32.totalorder %s17, 1
        %s161 = scalar_select %p160, %s17, 1
        %s162 = scalar_lea.vmem %s0, %s161
        %v163 = vld [vmem:[%s162] sm:$0x1]
        %v164 = vld [vmem:[%s1] sm:$0xff]
        %v165 = vld [vmem:[%s1 + $0x8] sm:$0xff]
        %v166 = vld [vmem:[%s1 + $0x10] sm:$0xff]
        %v167 = vld [vmem:[%s1 + $0x18] sm:$0xff]
        %v168 = vand.u32 %v163, 1
        %v169 = vshra.s32 %v163, 1
        %v170 = vcvt.s32.f32 %v168
        %v171 = vadd.f32 %v170, 0.0
        %v172 = vand.u32 %v169, 1
        %v173 = vshra.s32 %v169, 1
        %v174 = vcvt.s32.f32 %v172
        %v175 = vadd.f32 %v171, %v174
        %v176 = vand.u32 %v173, 1
        %v177 = vshra.s32 %v173, 1
        %v178 = vcvt.s32.f32 %v176
        %v179 = vadd.f32 %v175, %v178
        %v180 = vand.u32 %v177, 1
        %v181 = vshra.s32 %v177, 1
        %v182 = vcvt.s32.f32 %v180
        %v183 = vadd.f32 %v179, %v182
        %v184 = vand.u32 %v181, 1
        %v185 = vshra.s32 %v181, 1
        %v186 = vcvt.s32.f32 %v184
        %v187 = vadd.f32 %v183, %v186
        %v188 = vand.u32 %v185, 1
        %v189 = vshra.s32 %v185, 1
        %v190 = vcvt.s32.f32 %v188
        %v191 = vadd.f32 %v187, %v190
        %v192 = vand.u32 %v189, 1
        %v193 = vshra.s32 %v189, 1
        %v194 = vcvt.s32.f32 %v192
        %v195 = vadd.f32 %v191, %v194
        %v196 = vand.u32 %v193, 1
        %v197 = vcvt.s32.f32 %v196
        %v198 = vadd.f32 %v195, %v197
        %v199 = vmul.f32 %v164, 8.0
        %v200 = vmul.f32 %v165, 8.0
        %v201 = vmul.f32 %v166, 8.0
        %v202 = vmul.f32 %v167, 8.0
        %204 = vset.pattern.permute.xlu0 0
        %205 = vperm.xlu0 %204, %v199
        %v206 = vpop.permute.xlu0 %205
        %209 = vset.pattern.permute.xlu0 0
        %210 = vperm.xlu0 %209, %v200
        %v211 = vpop.permute.xlu0 %210
        %214 = vset.pattern.permute.xlu0 0
        %215 = vperm.xlu0 %214, %v201
        %v216 = vpop.permute.xlu0 %215
        %219 = vset.pattern.permute.xlu0 0
        %220 = vperm.xlu0 %219, %v202
        %v221 = vpop.permute.xlu0 %220
        %227 = vrot.lane.b32.xlu0 %v164, 1
        %v228 = vpop.permute.xlu0 %227
        %229 = vrot.lane.b32.xlu0 %v165, 1
        %v230 = vpop.permute.xlu0 %229
        %231 = vrot.lane.b32.xlu0 %v166, 1
        %v232 = vpop.permute.xlu0 %231
        %233 = vrot.lane.b32.xlu0 %v167, 1
        %v234 = vpop.permute.xlu0 %233
        %v239 = vsub.f32 %v164, %v228
        %v240 = vsub.f32 %v165, %v230
        %v241 = vsub.f32 %v166, %v232
        %v242 = vsub.f32 %v167, %v234
        %244 = vset.pattern.permute.xlu0 1
        %245 = vperm.xlu0 %244, %v239
        %v246 = vpop.permute.xlu0 %245
        %249 = vset.pattern.permute.xlu0 1
        %250 = vperm.xlu0 %249, %v240
        %v251 = vpop.permute.xlu0 %250
        %254 = vset.pattern.permute.xlu0 1
        %255 = vperm.xlu0 %254, %v241
        %v256 = vpop.permute.xlu0 %255
        %259 = vset.pattern.permute.xlu0 1
        %260 = vperm.xlu0 %259, %v242
        %v261 = vpop.permute.xlu0 %260
        %v264 = vlaneseq
        %v265 = vshrl.u32 %v264, 7
        %v266 = vsub.s32 0, %v265
        %v267 = vrot.slane %v198, %v266
        %v269 = vmul.f32 %v246, %v267
        %v270 = vmul.f32 %v251, %v267
        %v271 = vmul.f32 %v256, %v267
        %v272 = vmul.f32 %v261, %v267
        %v273 = vadd.f32 %v206, %v269
        %v274 = vadd.f32 %v211, %v270
        %v275 = vadd.f32 %v216, %v271
        %v276 = vadd.f32 %v221, %v272
        %277 = vst [vmem:[%s159] sm:$0xff] %v273
        %278 = vst [vmem:[%s159 + $0x8] sm:$0xff] %v274
        %279 = vst [vmem:[%s159 + $0x10] sm:$0xff] %v275
        %280 = vst [vmem:[%s159 + $0x18] sm:$0xff] %v276
        %v281 = vld [vmem:[%s2] sm:$0xff]
        %v282 = vld [vmem:[%s2 + $0x8] sm:$0xff]
        %v283 = vld [vmem:[%s2 + $0x10] sm:$0xff]
        %v284 = vld [vmem:[%s2 + $0x18] sm:$0xff]
        %vm285 = vcmp.lt.s32.totalorder %v163, 0
        %v286 = vsub.s32 0, %v163
        %v287 = vsel %vm285, %v286, %v163
        %v288 = vmul.u32.u64.compose %v287, 2863311531
        %v289 = vextract.low.u32 %v288
        %v290 = vextract.high.u32 %v288
        %v291 = vshrl.u32 %v290, 1
        %v292 = vmul.u32 %v291, 3
        %v293 = vsub.s32 %v287, %v292
        %v294 = vsub.s32 0, %v291
        %v295 = vsel %vm285, %v294, %v291
        %v296 = vmul.u32 %v295, 3
        %v297 = vsub.s32 %v163, %v296
        %vm298 = vcmp.eq.s32.totalorder %v297, 1
        %v299 = vsel %vm298, 1, 0
        %v300 = vcvt.s32.f32 %v299
        %v301 = vadd.f32 %v300, 0.0
        %vm302 = vcmp.eq.s32.totalorder %v297, 2
        %v303 = vsel %vm302, 1, 0
        %v304 = vcvt.s32.f32 %v303
        %v305 = vadd.f32 %v304, 0.0
        %vm306 = vcmp.lt.s32.totalorder %v295, 0
        %v307 = vsub.s32 0, %v295
        %v308 = vsel %vm306, %v307, %v295
        %v309 = vmul.u32.u64.compose %v308, 2863311531
        %v310 = vextract.low.u32 %v309
        %v311 = vextract.high.u32 %v309
        %v312 = vshrl.u32 %v311, 1
        %v313 = vmul.u32 %v312, 3
        %v314 = vsub.s32 %v308, %v313
        %v315 = vsub.s32 0, %v312
        %v316 = vsel %vm306, %v315, %v312
        %v317 = vmul.u32 %v316, 3
        %v318 = vsub.s32 %v295, %v317
        %vm319 = vcmp.eq.s32.totalorder %v318, 1
        %v320 = vsel %vm319, 1, 0
        %v321 = vcvt.s32.f32 %v320
        %v322 = vadd.f32 %v301, %v321
        %vm323 = vcmp.eq.s32.totalorder %v318, 2
        %v324 = vsel %vm323, 1, 0
        %v325 = vcvt.s32.f32 %v324
        %v326 = vadd.f32 %v305, %v325
        %vm327 = vcmp.lt.s32.totalorder %v316, 0
        %v328 = vsub.s32 0, %v316
        %v329 = vsel %vm327, %v328, %v316
        %v330 = vmul.u32.u64.compose %v329, 2863311531
        %v331 = vextract.low.u32 %v330
        %v332 = vextract.high.u32 %v330
        %v333 = vshrl.u32 %v332, 1
        %v334 = vmul.u32 %v333, 3
        %v335 = vsub.s32 %v329, %v334
        %v336 = vsub.s32 0, %v333
        %v337 = vsel %vm327, %v336, %v333
        %v338 = vmul.u32 %v337, 3
        %v339 = vsub.s32 %v316, %v338
        %vm340 = vcmp.eq.s32.totalorder %v339, 1
        %v341 = vsel %vm340, 1, 0
        %v342 = vcvt.s32.f32 %v341
        %v343 = vadd.f32 %v322, %v342
        %vm344 = vcmp.eq.s32.totalorder %v339, 2
        %v345 = vsel %vm344, 1, 0
        %v346 = vcvt.s32.f32 %v345
        %v347 = vadd.f32 %v326, %v346
        %vm348 = vcmp.lt.s32.totalorder %v337, 0
        %v349 = vsub.s32 0, %v337
        %v350 = vsel %vm348, %v349, %v337
        %v351 = vmul.u32.u64.compose %v350, 2863311531
        %v352 = vextract.low.u32 %v351
        %v353 = vextract.high.u32 %v351
        %v354 = vshrl.u32 %v353, 1
        %v355 = vmul.u32 %v354, 3
        %v356 = vsub.s32 %v350, %v355
        %v357 = vsub.s32 0, %v354
        %v358 = vsel %vm348, %v357, %v354
        %v359 = vmul.u32 %v358, 3
        %v360 = vsub.s32 %v337, %v359
        %vm361 = vcmp.eq.s32.totalorder %v360, 1
        %v362 = vsel %vm361, 1, 0
        %v363 = vcvt.s32.f32 %v362
        %v364 = vadd.f32 %v343, %v363
        %vm365 = vcmp.eq.s32.totalorder %v360, 2
        %v366 = vsel %vm365, 1, 0
        %v367 = vcvt.s32.f32 %v366
        %v368 = vadd.f32 %v347, %v367
        %vm369 = vcmp.lt.s32.totalorder %v358, 0
        %v370 = vsub.s32 0, %v358
        %v371 = vsel %vm369, %v370, %v358
        %v372 = vmul.u32.u64.compose %v371, 2863311531
        %v373 = vextract.low.u32 %v372
        %v374 = vextract.high.u32 %v372
        %v375 = vshrl.u32 %v374, 1
        %v376 = vmul.u32 %v375, 3
        %v377 = vsub.s32 %v371, %v376
        %v378 = vsub.s32 0, %v375
        %v379 = vsel %vm369, %v378, %v375
        %v380 = vmul.u32 %v379, 3
        %v381 = vsub.s32 %v358, %v380
        %vm382 = vcmp.eq.s32.totalorder %v381, 1
        %v383 = vsel %vm382, 1, 0
        %v384 = vcvt.s32.f32 %v383
        %v385 = vadd.f32 %v364, %v384
        %vm386 = vcmp.eq.s32.totalorder %v381, 2
        %v387 = vsel %vm386, 1, 0
        %v388 = vcvt.s32.f32 %v387
        %v389 = vadd.f32 %v368, %v388
        %vm390 = vcmp.lt.s32.totalorder %v379, 0
        %v391 = vsub.s32 0, %v379
        %v392 = vsel %vm390, %v391, %v379
        %v393 = vmul.u32.u64.compose %v392, 2863311531
        %v394 = vextract.low.u32 %v393
        %v395 = vextract.high.u32 %v393
        %v396 = vshrl.u32 %v395, 1
        %v397 = vmul.u32 %v396, 3
        %v398 = vsub.s32 %v392, %v397
        %v399 = vsub.s32 0, %v396
        %v400 = vsel %vm390, %v399, %v396
        %v401 = vmul.u32 %v400, 3
        %v402 = vsub.s32 %v379, %v401
        %vm403 = vcmp.eq.s32.totalorder %v402, 1
        %v404 = vsel %vm403, 1, 0
        %v405 = vcvt.s32.f32 %v404
        %v406 = vadd.f32 %v385, %v405
        %vm407 = vcmp.eq.s32.totalorder %v402, 2
        %v408 = vsel %vm407, 1, 0
        %v409 = vcvt.s32.f32 %v408
        %v410 = vadd.f32 %v389, %v409
        %vm411 = vcmp.lt.s32.totalorder %v400, 0
        %v412 = vsub.s32 0, %v400
        %v413 = vsel %vm411, %v412, %v400
        %v414 = vmul.u32.u64.compose %v413, 2863311531
        %v415 = vextract.low.u32 %v414
        %v416 = vextract.high.u32 %v414
        %v417 = vshrl.u32 %v416, 1
        %v418 = vmul.u32 %v417, 3
        %v419 = vsub.s32 %v413, %v418
        %v420 = vsub.s32 0, %v417
        %v421 = vsel %vm411, %v420, %v417
        %v422 = vmul.u32 %v421, 3
        %v423 = vsub.s32 %v400, %v422
        %vm424 = vcmp.eq.s32.totalorder %v423, 1
        %v425 = vsel %vm424, 1, 0
        %v426 = vcvt.s32.f32 %v425
        %v427 = vadd.f32 %v406, %v426
        %vm428 = vcmp.eq.s32.totalorder %v423, 2
        %v429 = vsel %vm428, 1, 0
        %v430 = vcvt.s32.f32 %v429
        %v431 = vadd.f32 %v410, %v430
        %vm432 = vcmp.lt.s32.totalorder %v421, 0
        %v433 = vsub.s32 0, %v421
        %v434 = vsel %vm432, %v433, %v421
        %v435 = vmul.u32.u64.compose %v434, 2863311531
        %v436 = vextract.low.u32 %v435
        %v437 = vextract.high.u32 %v435
        %v438 = vshrl.u32 %v437, 1
        %v439 = vmul.u32 %v438, 3
        %v440 = vsub.s32 %v434, %v439
        %v441 = vsub.s32 0, %v438
        %v442 = vsel %vm432, %v441, %v438
        %v443 = vmul.u32 %v442, 3
        %v444 = vsub.s32 %v421, %v443
        %vm445 = vcmp.eq.s32.totalorder %v444, 1
        %v446 = vsel %vm445, 1, 0
        %v447 = vcvt.s32.f32 %v446
        %v448 = vadd.f32 %v427, %v447
        %vm449 = vcmp.eq.s32.totalorder %v444, 2
        %v450 = vsel %vm449, 1, 0
        %v451 = vcvt.s32.f32 %v450
        %v452 = vadd.f32 %v431, %v451
        %v453 = vmul.f32 %v281, 8.0
        %v454 = vmul.f32 %v282, 8.0
        %v455 = vmul.f32 %v283, 8.0
        %v456 = vmul.f32 %v284, 8.0
        %458 = vset.pattern.permute.xlu0 0
        %459 = vperm.xlu0 %458, %v453
        %v460 = vpop.permute.xlu0 %459
        %463 = vset.pattern.permute.xlu0 0
        %464 = vperm.xlu0 %463, %v454
        %v465 = vpop.permute.xlu0 %464
        %468 = vset.pattern.permute.xlu0 0
        %469 = vperm.xlu0 %468, %v455
        %v470 = vpop.permute.xlu0 %469
        %473 = vset.pattern.permute.xlu0 0
        %474 = vperm.xlu0 %473, %v456
        %v475 = vpop.permute.xlu0 %474
        %481 = vrot.lane.b32.xlu0 %v281, 1
        %v482 = vpop.permute.xlu0 %481
        %483 = vrot.lane.b32.xlu0 %v282, 1
        %v484 = vpop.permute.xlu0 %483
        %485 = vrot.lane.b32.xlu0 %v283, 1
        %v486 = vpop.permute.xlu0 %485
        %487 = vrot.lane.b32.xlu0 %v284, 1
        %v488 = vpop.permute.xlu0 %487
        %v493 = vsub.f32 %v281, %v482
        %v494 = vsub.f32 %v282, %v484
        %v495 = vsub.f32 %v283, %v486
        %v496 = vsub.f32 %v284, %v488
        %498 = vset.pattern.permute.xlu0 1
        %499 = vperm.xlu0 %498, %v493
        %v500 = vpop.permute.xlu0 %499
        %503 = vset.pattern.permute.xlu0 1
        %504 = vperm.xlu0 %503, %v494
        %v505 = vpop.permute.xlu0 %504
        %508 = vset.pattern.permute.xlu0 1
        %509 = vperm.xlu0 %508, %v495
        %v510 = vpop.permute.xlu0 %509
        %513 = vset.pattern.permute.xlu0 1
        %514 = vperm.xlu0 %513, %v496
        %v515 = vpop.permute.xlu0 %514
        %v518 = vlaneseq
        %v519 = vshrl.u32 %v518, 7
        %v520 = vsub.s32 0, %v519
        %v521 = vrot.slane %v448, %v520
        %v523 = vmul.f32 %v500, %v521
        %v524 = vmul.f32 %v505, %v521
        %v525 = vmul.f32 %v510, %v521
        %v526 = vmul.f32 %v515, %v521
        %v527 = vadd.f32 %v460, %v523
        %v528 = vadd.f32 %v465, %v524
        %v529 = vadd.f32 %v470, %v525
        %v530 = vadd.f32 %v475, %v526
        %531 = vrot.lane.b32.xlu0 %v281, 2
        %v532 = vpop.permute.xlu0 %531
        %533 = vrot.lane.b32.xlu0 %v282, 2
        %v534 = vpop.permute.xlu0 %533
        %535 = vrot.lane.b32.xlu0 %v283, 2
        %v536 = vpop.permute.xlu0 %535
        %537 = vrot.lane.b32.xlu0 %v284, 2
        %v538 = vpop.permute.xlu0 %537
        %v543 = vsub.f32 %v281, %v532
        %v544 = vsub.f32 %v282, %v534
        %v545 = vsub.f32 %v283, %v536
        %v546 = vsub.f32 %v284, %v538
        %548 = vset.pattern.permute.xlu0 2
        %549 = vperm.xlu0 %548, %v543
        %v550 = vpop.permute.xlu0 %549
        %553 = vset.pattern.permute.xlu0 2
        %554 = vperm.xlu0 %553, %v544
        %v555 = vpop.permute.xlu0 %554
        %558 = vset.pattern.permute.xlu0 2
        %559 = vperm.xlu0 %558, %v545
        %v560 = vpop.permute.xlu0 %559
        %563 = vset.pattern.permute.xlu0 2
        %564 = vperm.xlu0 %563, %v546
        %v565 = vpop.permute.xlu0 %564
        %v568 = vlaneseq
        %v569 = vshrl.u32 %v568, 7
        %v570 = vsub.s32 0, %v569
        %v571 = vrot.slane %v452, %v570
        %v573 = vmul.f32 %v550, %v571
        %v574 = vmul.f32 %v555, %v571
        %v575 = vmul.f32 %v560, %v571
        %v576 = vmul.f32 %v565, %v571
        %v577 = vadd.f32 %v527, %v573
        %v578 = vadd.f32 %v528, %v574
        %v579 = vadd.f32 %v529, %v575
        %v580 = vadd.f32 %v530, %v576
        %581 = vst [vmem:[%s159 + $0x20] sm:$0xff] %v577
        %582 = vst [vmem:[%s159 + $0x28] sm:$0xff] %v578
        %583 = vst [vmem:[%s159 + $0x30] sm:$0xff] %v579
        %584 = vst [vmem:[%s159 + $0x38] sm:$0xff] %v580
        %s585 = sand.u32 %s93, 1
        %s586 = scalar_lea.sflag [#allocation3], %s585
        %s587 = sand.u32 %s93, 1
        %s588 = smul.addr %s587, 64
        %s589 = scalar_lea.vmem [#allocation2], %s588
        // Predicated region
        $region33: #{tpu_custom_call.1} parent=31 // pred_check
          %p590 = pneg %p103
        $region34: #{tpu_custom_call.1} parent=31 // pred_check_branch
          %592 = sbr.rel (%p590) target = $region36
        $region35: #{tpu_custom_call.1} parent=31 // pred_region
          %s594 = ssub.s32 1024, 1024
          %595 = vsyncadd %s586, %s594
          %s596 = smul.addr %s17, 128
          %s597 = scalar_lea.hbm %s3, %s596
          %s598 = sshll.u32 %s589, 4
          %s599 = int_to_ptr.vmem [resolvable:$true] %s598
          %604 = dma.vmem_to_hbm [thread:$0]  %s599, 1024, %s597, %s586, 128, 256, 8
        $region36: #{tpu_custom_call.1} parent=31 // pred_fallthru
          _
      $region32: #{tpu_custom_call.1} parent=5 // pred_fallthru
        _
      %p605 = scmp.le.s32.totalorder 2, %s12
      // Predicated region
      $region37: #{tpu_custom_call.1} parent=5 // pred_check
        %p606 = pneg %p605
      $region38: #{tpu_custom_call.1} parent=5 // pred_check_branch
        %608 = sbr.rel (%p606) target = $region40
      $region39: #{tpu_custom_call.1} parent=5 // pred_region
        %s609 = ssub.s32 %s12, 2
        // Predicated region
        $region41: #{tpu_custom_call.1} parent=39 // pred_check
          %p610 = pneg %p109
        $region42: #{tpu_custom_call.1} parent=39 // pred_check_branch
          %612 = sbr.rel (%p610) target = $region44
        $region43: #{tpu_custom_call.1} parent=39 // pred_region
          %s613 = sand.u32 %s94, 1
          %s614 = scalar_lea.sflag [#allocation3], %s613
          %s615 = sand.u32 %s94, 1
          %s616 = smul.addr %s615, 64
          %s617 = scalar_lea.vmem [#allocation2], %s616
          %618 = dma.done %s614, 1024
        $region44: #{tpu_custom_call.1} parent=39 // pred_fallthru
          _
      $region40: #{tpu_custom_call.1} parent=5 // pred_fallthru
        _
    $region6: #{tpu_custom_call.1} parent=1 // loop_footer
      %s16 = sadd.s32 1, %s12
    $region7: #{tpu_custom_call.1} parent=1 // loop_footer_branch
      %11 = sbr.rel target = $region3
    $region8: #{tpu_custom_call.1} parent=1 // loop_exit
      _
    %619 = vsyncpa [#allocation3], 1
    %s620 = scalar_lea.sflag [#allocation3], 1
    %621 = vsyncpa %s620, 1

</llo_original>
